<compile_context>
chip_gen: v7x
topology: tpu7x:2x2x1
jax: 0.10.0
libtpu: 0.0.40
codegen_flags: <defaults>
</compile_context>

<pallas_src>
import jax
import jax.numpy as jnp
from jax import lax
from jax.experimental import pallas as pl
from jax.experimental.pallas import tpu as pltpu

B = 2            # example batch
F = 10000        # flattened feature dim (hard-coded by adapt_input)
FP = 10240       # F padded to a multiple of 128 lanes
C = 10           # synthetic classifier output classes
SUBLANE = 8      # f32 sublane count; batch bucket granularity


def _round_up(n, m):
    return ((n + m - 1) // m) * m


def linear_kernel(x_ref, wt_ref, b_ref, o_ref):
    # x:  (Bp, FP) float32   (activations, FP on lane axis, zero-padded lanes)
    # wt: (C,  FP) bfloat16  (weight, transposed & lane-major, zero-padded lanes)
    # b:  (1,  C)  float32
    # o:  (Bp, C)  float32
    x_bf16 = x_ref[...].astype(jnp.bfloat16)           # feed MXU bf16, accumulate f32
    acc = lax.dot_general(
        x_bf16,
        wt_ref[...],
        dimension_numbers=(((1,), (1,)), ((), ())),     # contract last axes: (Bp,FP)x(C,FP)->(Bp,C)
        preferred_element_type=jnp.float32,
    )
    o_ref[...] = acc + b_ref[...]


def adapted_model_forward(x, w_t, b):
    # --- adapt_input: reshape(-1, 1, 1, 10000) ---
    x = x.reshape(-1, 1, 1, F)
    # --- x.view(x.size(0), -1) ---
    x = x.reshape(x.shape[0], -1)
    # --- x.to(torch.float32) ---
    x = x.astype(jnp.float32)

    batch = x.shape[0]
    # Bucket the batch to a multiple of 8 so arbitrary AutoAttack batch sizes don't each
    # trigger a recompile, and sublane rows are fully used.  Feature dim zero-padded to FP.
    bp = max(_round_up(batch, SUBLANE), SUBLANE)
    x_p = jnp.pad(x, ((0, bp - batch), (0, FP - F)))

    out = pl.pallas_call(
        linear_kernel,
        out_shape=jax.ShapeDtypeStruct((bp, C), jnp.float32),
        in_specs=[
            pl.BlockSpec(memory_space=pltpu.MemorySpace.VMEM),  # activations (whole array)
            pl.BlockSpec(memory_space=pltpu.MemorySpace.VMEM),  # weight, lane-major
            pl.BlockSpec(memory_space=pltpu.MemorySpace.VMEM),  # bias
        ],
        out_specs=pl.BlockSpec(memory_space=pltpu.MemorySpace.VMEM),
        cost_estimate=pl.CostEstimate(
            flops=2 * bp * FP * C,
            bytes_accessed=bp * FP * 4 + C * FP * 2 + C * 4 + bp * C * 4,
            transcendentals=0,
        ),
    )(x_p, w_t, b)
    # Slice back to the true (un-bucketed) batch.
    return out[:batch]


if __name__ == "__main__":
    key = jax.random.PRNGKey(0)
    k_x, k_w, k_b = jax.random.split(key, 3)

    # Input as it would be handed to AdaptedModel (element count divisible by 10000);
    # use a non-flat shape to exercise the adapt_input reshape path.
    x = jax.random.normal(k_x, (B, 100, 100), dtype=jnp.float32)

    # Deterministic synthetic parameters for the wrapped original_model
    # (nn.Linear(10000, 10) equivalent): stored transposed (C, F), zero-padded to FP lanes,
    # kept in bf16 in HBM.
    w_f32 = jax.random.normal(k_w, (C, F), dtype=jnp.float32) * (1.0 / jnp.sqrt(F))
    w_t = jnp.pad(w_f32, ((0, 0), (0, FP - F))).astype(jnp.bfloat16)   # (C, FP) bf16
    b = (jax.random.normal(k_b, (1, C), dtype=jnp.float32) * 0.01).astype(jnp.float32)

    logits = adapted_model_forward(x, w_t, b)
    jax.block_until_ready(logits)

    # Reference check in plain JAX using the same bf16-rounded operands (f32 accumulate).
    x_flat = x.reshape(-1, 1, 1, F).reshape(B, -1).astype(jnp.float32)
    x_ref = x_flat.astype(jnp.bfloat16).astype(jnp.float32)
    w_ref = w_t[:, :F].astype(jnp.float32).T                           # (F, C)
    ref = x_ref @ w_ref + b

    assert logits.shape == (B, C)
    assert jnp.allclose(logits, ref, atol=1e-2, rtol=1e-2)

    print("KERNEL_OK")
</pallas_src>

<mosaic_0001>
module attributes {stable_mosaic.version = 11 : i64} {
  func.func @linear_kernel(%arg0: memref<8x10240xf32, #tpu.memory_space<vmem>>, %arg1: memref<10x10240xbf16, #tpu.memory_space<vmem>>, %arg2: memref<1x10xf32, #tpu.memory_space<vmem>>, %arg3: memref<8x10xf32, #tpu.memory_space<vmem>>) attributes {dimension_semantics = [], scalar_prefetch = 0 : i64, scratch_operands = 0 : i64, tpu.core_type = #tpu.core_type<tc>} {
    %c0 = arith.constant 0 : index
    %c0_0 = arith.constant 0 : index
    %0 = vector.load %arg0[%c0, %c0_0] : memref<8x10240xf32, #tpu.memory_space<vmem>>, vector<8x10240xf32>
    %1 = arith.truncf %0 : vector<8x10240xf32> to vector<8x10240xbf16>
    %c0_1 = arith.constant 0 : index
    %c0_2 = arith.constant 0 : index
    %2 = vector.load %arg1[%c0_1, %c0_2] : memref<10x10240xbf16, #tpu.memory_space<vmem>>, vector<10x10240xbf16>
    %cst = arith.constant dense<0.000000e+00> : vector<8x10xf32>
    %3 = tpu.matmul %1, %2, %cst {dimension_numbers = #tpu.dot_dimension_numbers<[1], [1], [0], [0], [0, 0, 1, 0], [], []>} : vector<8x10240xbf16>, vector<10x10240xbf16>, vector<8x10xf32> -> vector<8x10xf32>
    %c0_3 = arith.constant 0 : index
    %c0_4 = arith.constant 0 : index
    %4 = vector.load %arg2[%c0_3, %c0_4] : memref<1x10xf32, #tpu.memory_space<vmem>>, vector<1x10xf32>
    %5 = vector.broadcast %4 : vector<1x10xf32> to vector<8x10xf32>
    %6 = arith.addf %3, %5 : vector<8x10xf32>
    %c0_5 = arith.constant 0 : index
    %c0_6 = arith.constant 0 : index
    %7 = vector.load %arg3[%c0_5, %c0_6] : memref<8x10xf32, #tpu.memory_space<vmem>>, vector<8x10xf32>
    tpu.vector_store %arg3[%c0_5, %c0_6], %6 {strides = array<i32>} : memref<8x10xf32, #tpu.memory_space<vmem>>, vector<8x10xf32>,
    return
  }
}

</mosaic_0001>

<llo_original>
// kernel: tpu_custom_call.1
$region0: #{tpu_custom_call.1}
  #allocation0 [shape = 'u32[]', space=smem, size = 0x4, offset = 0x4, fixed_abs, tag = 'smem constant byte address 0x4 - core index']
  #allocation1 [shape = 'u32[144,128]{1,0:T(1,128)}', space=vmem, size = 0x12000, scoped, tag = 'internal scratch']
  %s0 = inlined_call_operand.hbm [shape: f32[8,10240], index: 0, kind: input, shape index: {}]
  %s1 = inlined_call_operand.hbm [shape: bf16[10,10240], index: 1, kind: input, shape index: {}]
  %s2 = inlined_call_operand.vmem [shape: f32[1,10], index: 2, kind: input, shape index: {}]
  %s3 = inlined_call_operand.hbm [shape: f32[8,10], index: 3, kind: output, shape index: {}]
  %s4 = sld [smem:[#allocation0]]
  $region30: #{tpu_custom_call.1} parent=0
    _
  %s6 = ssub.s32 1, %s4
  %s7 = scalar_select 0, %s6, %s4
  $region1: #{tpu_custom_call.1} parent=0
    #allocation2 [shape = 'u8[327680]{0}', space=vmem, size = 0x50000, scoped, tag = 'input window, operand 0, single buffered']
    #allocation3 [shape = 's32[1]{0}', space=sflag, size = 0x4, scoped, tag = 'scoped memory for tpu_custom_call.1']
    #allocation4 [shape = 's32[1]{0}', space=sflag, size = 0x4, scoped, tag = 'scoped memory for tpu_custom_call.1']
    #allocation5 [shape = 'u8[327680]{0}', space=vmem, size = 0x50000, scoped, tag = 'input window, operand 1, single buffered']
    #allocation6 [shape = 's32[1]{0}', space=sflag, size = 0x4, scoped, tag = 'scoped memory for tpu_custom_call.1']
    #allocation7 [shape = 'u8[4096]{0}', space=vmem, size = 0x1000, scoped, tag = 'output window, operand 0, single buffered']
    %8 = vsyncpa [#allocation3], 0
    %9 = vsyncpa [#allocation6], 0
    %10 = vsyncpa [#allocation4], 0
    // Predicated region
    $region2: #{tpu_custom_call.1} parent=1 // pred_check
      _
    $region3: #{tpu_custom_call.1} parent=1 // pred_check_branch
      %12 = sbr.rel (0) target = $region5
    $region4: #{tpu_custom_call.1} parent=1 // pred_region
      %s14 = ssub.s32 10240, 10240
      %15 = vsyncadd [#allocation3], %s14
      %s17 = sshll.u32 [#allocation2], 4
      %s18 = int_to_ptr.vmem [resolvable:$true] %s17
      %20 = dma.hbm_to_vmem [thread:$0]  %s0, 10240, %s18, [#allocation3]
    $region5: #{tpu_custom_call.1} parent=1 // pred_fallthru
      _
    // Predicated region
    $region6: #{tpu_custom_call.1} parent=1 // pred_check
      _
    $region7: #{tpu_custom_call.1} parent=1 // pred_check_branch
      %22 = sbr.rel (0) target = $region9
    $region8: #{tpu_custom_call.1} parent=1 // pred_region
      %s24 = ssub.s32 10240, 10240
      %25 = vsyncadd [#allocation6], %s24
      %s26 = sshll.u32 [#allocation5], 4
      %s27 = int_to_ptr.vmem [resolvable:$true] %s26
      %32 = dma.hbm_to_vmem [thread:$0]  %s1, 10240, %s27, [#allocation6], 5120, 5120, 320
    $region9: #{tpu_custom_call.1} parent=1 // pred_fallthru
      _
    // Predicated region
    $region10: #{tpu_custom_call.1} parent=1 // pred_check
      _
    $region11: #{tpu_custom_call.1} parent=1 // pred_check_branch
      %34 = sbr.rel (0) target = $region13
    $region12: #{tpu_custom_call.1} parent=1 // pred_region
      _
    $region13: #{tpu_custom_call.1} parent=1 // pred_fallthru
      _
    // Predicated region
    $region14: #{tpu_custom_call.1} parent=1 // pred_check
      _
    $region15: #{tpu_custom_call.1} parent=1 // pred_check_branch
      %36 = sbr.rel (0) target = $region17
    $region16: #{tpu_custom_call.1} parent=1 // pred_region
      %37 = dma.done [#allocation3], 10240
    $region17: #{tpu_custom_call.1} parent=1 // pred_fallthru
      _
    // Predicated region
    $region18: #{tpu_custom_call.1} parent=1 // pred_check
      _
    $region19: #{tpu_custom_call.1} parent=1 // pred_check_branch
      %39 = sbr.rel (0) target = $region21
    $region20: #{tpu_custom_call.1} parent=1 // pred_region
      %40 = dma.done [#allocation6], 10240
    $region21: #{tpu_custom_call.1} parent=1 // pred_fallthru
      _
    %v42 = vld [vmem:[#allocation2] sm:$0xff]
    %v43 = vld [vmem:[#allocation2 + $0x8] sm:$0xff]
    %v44 = vld [vmem:[#allocation2 + $0x10] sm:$0xff]
    %v45 = vld [vmem:[#allocation2 + $0x18] sm:$0xff]
    %v46 = vld [vmem:[#allocation2 + $0x20] sm:$0xff]
    %v47 = vld [vmem:[#allocation2 + $0x28] sm:$0xff]
    %v48 = vld [vmem:[#allocation2 + $0x30] sm:$0xff]
    %v49 = vld [vmem:[#allocation2 + $0x38] sm:$0xff]
    %v50 = vld [vmem:[#allocation2 + $0x40] sm:$0xff]
    %v51 = vld [vmem:[#allocation2 + $0x48] sm:$0xff]
    %v52 = vld [vmem:[#allocation2 + $0x50] sm:$0xff]
    %v53 = vld [vmem:[#allocation2 + $0x58] sm:$0xff]
    %v54 = vld [vmem:[#allocation2 + $0x60] sm:$0xff]
    %v55 = vld [vmem:[#allocation2 + $0x68] sm:$0xff]
    %v56 = vld [vmem:[#allocation2 + $0x70] sm:$0xff]
    %v57 = vld [vmem:[#allocation2 + $0x78] sm:$0xff]
    %v58 = vld [vmem:[#allocation2 + $0x80] sm:$0xff]
    %v59 = vld [vmem:[#allocation2 + $0x88] sm:$0xff]
    %v60 = vld [vmem:[#allocation2 + $0x90] sm:$0xff]
    %v61 = vld [vmem:[#allocation2 + $0x98] sm:$0xff]
    %v62 = vld [vmem:[#allocation2 + $0xa0] sm:$0xff]
    %v63 = vld [vmem:[#allocation2 + $0xa8] sm:$0xff]
    %v64 = vld [vmem:[#allocation2 + $0xb0] sm:$0xff]
    %v65 = vld [vmem:[#allocation2 + $0xb8] sm:$0xff]
    %v66 = vld [vmem:[#allocation2 + $0xc0] sm:$0xff]
    %v67 = vld [vmem:[#allocation2 + $0xc8] sm:$0xff]
    %v68 = vld [vmem:[#allocation2 + $0xd0] sm:$0xff]
    %v69 = vld [vmem:[#allocation2 + $0xd8] sm:$0xff]
    %v70 = vld [vmem:[#allocation2 + $0xe0] sm:$0xff]
    %v71 = vld [vmem:[#allocation2 + $0xe8] sm:$0xff]
    %v72 = vld [vmem:[#allocation2 + $0xf0] sm:$0xff]
    %v73 = vld [vmem:[#allocation2 + $0xf8] sm:$0xff]
    %v74 = vld [vmem:[#allocation2 + $0x100] sm:$0xff]
    %v75 = vld [vmem:[#allocation2 + $0x108] sm:$0xff]
    %v76 = vld [vmem:[#allocation2 + $0x110] sm:$0xff]
    %v77 = vld [vmem:[#allocation2 + $0x118] sm:$0xff]
    %v78 = vld [vmem:[#allocation2 + $0x120] sm:$0xff]
    %v79 = vld [vmem:[#allocation2 + $0x128] sm:$0xff]
    %v80 = vld [vmem:[#allocation2 + $0x130] sm:$0xff]
    %v81 = vld [vmem:[#allocation2 + $0x138] sm:$0xff]
    %v82 = vld [vmem:[#allocation2 + $0x140] sm:$0xff]
    %v83 = vld [vmem:[#allocation2 + $0x148] sm:$0xff]
    %v84 = vld [vmem:[#allocation2 + $0x150] sm:$0xff]
    %v85 = vld [vmem:[#allocation2 + $0x158] sm:$0xff]
    %v86 = vld [vmem:[#allocation2 + $0x160] sm:$0xff]
    %v87 = vld [vmem:[#allocation2 + $0x168] sm:$0xff]
    %v88 = vld [vmem:[#allocation2 + $0x170] sm:$0xff]
    %v89 = vld [vmem:[#allocation2 + $0x178] sm:$0xff]
    %v90 = vld [vmem:[#allocation2 + $0x180] sm:$0xff]
    %v91 = vld [vmem:[#allocation2 + $0x188] sm:$0xff]
    %v92 = vld [vmem:[#allocation2 + $0x190] sm:$0xff]
    %v93 = vld [vmem:[#allocation2 + $0x198] sm:$0xff]
    %v94 = vld [vmem:[#allocation2 + $0x1a0] sm:$0xff]
    %v95 = vld [vmem:[#allocation2 + $0x1a8] sm:$0xff]
    %v96 = vld [vmem:[#allocation2 + $0x1b0] sm:$0xff]
    %v97 = vld [vmem:[#allocation2 + $0x1b8] sm:$0xff]
    %v98 = vld [vmem:[#allocation2 + $0x1c0] sm:$0xff]
    %v99 = vld [vmem:[#allocation2 + $0x1c8] sm:$0xff]
    %v100 = vld [vmem:[#allocation2 + $0x1d0] sm:$0xff]
    %v101 = vld [vmem:[#allocation2 + $0x1d8] sm:$0xff]
    %v102 = vld [vmem:[#allocation2 + $0x1e0] sm:$0xff]
    %v103 = vld [vmem:[#allocation2 + $0x1e8] sm:$0xff]
    %v104 = vld [vmem:[#allocation2 + $0x1f0] sm:$0xff]
    %v105 = vld [vmem:[#allocation2 + $0x1f8] sm:$0xff]
    %v106 = vld [vmem:[#allocation2 + $0x200] sm:$0xff]
    %v107 = vld [vmem:[#allocation2 + $0x208] sm:$0xff]
    %v108 = vld [vmem:[#allocation2 + $0x210] sm:$0xff]
    %v109 = vld [vmem:[#allocation2 + $0x218] sm:$0xff]
    %v110 = vld [vmem:[#allocation2 + $0x220] sm:$0xff]
    %v111 = vld [vmem:[#allocation2 + $0x228] sm:$0xff]
    %v112 = vld [vmem:[#allocation2 + $0x230] sm:$0xff]
    %v113 = vld [vmem:[#allocation2 + $0x238] sm:$0xff]
    %v114 = vld [vmem:[#allocation2 + $0x240] sm:$0xff]
    %v115 = vld [vmem:[#allocation2 + $0x248] sm:$0xff]
    %v116 = vld [vmem:[#allocation2 + $0x250] sm:$0xff]
    %v117 = vld [vmem:[#allocation2 + $0x258] sm:$0xff]
    %v118 = vld [vmem:[#allocation2 + $0x260] sm:$0xff]
    %v119 = vld [vmem:[#allocation2 + $0x268] sm:$0xff]
    %v120 = vld [vmem:[#allocation2 + $0x270] sm:$0xff]
    %v121 = vld [vmem:[#allocation2 + $0x278] sm:$0xff]
    %v122 = vpack.c.bf16 %v42, %v42
    %v123 = vpack.c.bf16 %v43, %v43
    %v124 = vpack.c.bf16 %v44, %v44
    %v125 = vpack.c.bf16 %v45, %v45
    %v126 = vpack.c.bf16 %v46, %v46
    %v127 = vpack.c.bf16 %v47, %v47
    %v128 = vpack.c.bf16 %v48, %v48
    %v129 = vpack.c.bf16 %v49, %v49
    %v130 = vpack.c.bf16 %v50, %v50
    %v131 = vpack.c.bf16 %v51, %v51
    %v132 = vpack.c.bf16 %v52, %v52
    %v133 = vpack.c.bf16 %v53, %v53
    %v134 = vpack.c.bf16 %v54, %v54
    %v135 = vpack.c.bf16 %v55, %v55
    %v136 = vpack.c.bf16 %v56, %v56
    %v137 = vpack.c.bf16 %v57, %v57
    %v138 = vpack.c.bf16 %v58, %v58
    %v139 = vpack.c.bf16 %v59, %v59
    %v140 = vpack.c.bf16 %v60, %v60
    %v141 = vpack.c.bf16 %v61, %v61
    %v142 = vpack.c.bf16 %v62, %v62
    %v143 = vpack.c.bf16 %v63, %v63
    %v144 = vpack.c.bf16 %v64, %v64
    %v145 = vpack.c.bf16 %v65, %v65
    %v146 = vpack.c.bf16 %v66, %v66
    %v147 = vpack.c.bf16 %v67, %v67
    %v148 = vpack.c.bf16 %v68, %v68
    %v149 = vpack.c.bf16 %v69, %v69
    %v150 = vpack.c.bf16 %v70, %v70
    %v151 = vpack.c.bf16 %v71, %v71
    %v152 = vpack.c.bf16 %v72, %v72
    %v153 = vpack.c.bf16 %v73, %v73
    %v154 = vpack.c.bf16 %v74, %v74
    %v155 = vpack.c.bf16 %v75, %v75
    %v156 = vpack.c.bf16 %v76, %v76
    %v157 = vpack.c.bf16 %v77, %v77
    %v158 = vpack.c.bf16 %v78, %v78
    %v159 = vpack.c.bf16 %v79, %v79
    %v160 = vpack.c.bf16 %v80, %v80
    %v161 = vpack.c.bf16 %v81, %v81
    %v162 = vpack.c.bf16 %v82, %v82
    %v163 = vpack.c.bf16 %v83, %v83
    %v164 = vpack.c.bf16 %v84, %v84
    %v165 = vpack.c.bf16 %v85, %v85
    %v166 = vpack.c.bf16 %v86, %v86
    %v167 = vpack.c.bf16 %v87, %v87
    %v168 = vpack.c.bf16 %v88, %v88
    %v169 = vpack.c.bf16 %v89, %v89
    %v170 = vpack.c.bf16 %v90, %v90
    %v171 = vpack.c.bf16 %v91, %v91
    %v172 = vpack.c.bf16 %v92, %v92
    %v173 = vpack.c.bf16 %v93, %v93
    %v174 = vpack.c.bf16 %v94, %v94
    %v175 = vpack.c.bf16 %v95, %v95
    %v176 = vpack.c.bf16 %v96, %v96
    %v177 = vpack.c.bf16 %v97, %v97
    %v178 = vpack.c.bf16 %v98, %v98
    %v179 = vpack.c.bf16 %v99, %v99
    %v180 = vpack.c.bf16 %v100, %v100
    %v181 = vpack.c.bf16 %v101, %v101
    %v182 = vpack.c.bf16 %v102, %v102
    %v183 = vpack.c.bf16 %v103, %v103
    %v184 = vpack.c.bf16 %v104, %v104
    %v185 = vpack.c.bf16 %v105, %v105
    %v186 = vpack.c.bf16 %v106, %v106
    %v187 = vpack.c.bf16 %v107, %v107
    %v188 = vpack.c.bf16 %v108, %v108
    %v189 = vpack.c.bf16 %v109, %v109
    %v190 = vpack.c.bf16 %v110, %v110
    %v191 = vpack.c.bf16 %v111, %v111
    %v192 = vpack.c.bf16 %v112, %v112
    %v193 = vpack.c.bf16 %v113, %v113
    %v194 = vpack.c.bf16 %v114, %v114
    %v195 = vpack.c.bf16 %v115, %v115
    %v196 = vpack.c.bf16 %v116, %v116
    %v197 = vpack.c.bf16 %v117, %v117
    %v198 = vpack.c.bf16 %v118, %v118
    %v199 = vpack.c.bf16 %v119, %v119
    %v200 = vpack.c.bf16 %v120, %v120
    %v201 = vpack.c.bf16 %v121, %v121
    %v202 = vld [vmem:[#allocation5] sm:$0xff]
    %v203 = vld [vmem:[#allocation5 + $0x8] sm:$0xff]
    %v204 = vld [vmem:[#allocation5 + $0x10] sm:$0xff]
    %v205 = vld [vmem:[#allocation5 + $0x18] sm:$0xff]
    %v206 = vld [vmem:[#allocation5 + $0x20] sm:$0xff]
    %v207 = vld [vmem:[#allocation5 + $0x28] sm:$0xff]
    %v208 = vld [vmem:[#allocation5 + $0x30] sm:$0xff]
    %v209 = vld [vmem:[#allocation5 + $0x38] sm:$0xff]
    %v210 = vld [vmem:[#allocation5 + $0x40] sm:$0xff]
    %v211 = vld [vmem:[#allocation5 + $0x48] sm:$0xff]
    %v212 = vld [vmem:[#allocation5 + $0x50] sm:$0xff]
    %v213 = vld [vmem:[#allocation5 + $0x58] sm:$0xff]
    %v214 = vld [vmem:[#allocation5 + $0x60] sm:$0xff]
    %v215 = vld [vmem:[#allocation5 + $0x68] sm:$0xff]
    %v216 = vld [vmem:[#allocation5 + $0x70] sm:$0xff]
    %v217 = vld [vmem:[#allocation5 + $0x78] sm:$0xff]
    %v218 = vld [vmem:[#allocation5 + $0x80] sm:$0xff]
    %v219 = vld [vmem:[#allocation5 + $0x88] sm:$0xff]
    %v220 = vld [vmem:[#allocation5 + $0x90] sm:$0xff]
    %v221 = vld [vmem:[#allocation5 + $0x98] sm:$0xff]
    %v222 = vld [vmem:[#allocation5 + $0xa0] sm:$0xff]
    %v223 = vld [vmem:[#allocation5 + $0xa8] sm:$0xff]
    %v224 = vld [vmem:[#allocation5 + $0xb0] sm:$0xff]
    %v225 = vld [vmem:[#allocation5 + $0xb8] sm:$0xff]
    %v226 = vld [vmem:[#allocation5 + $0xc0] sm:$0xff]
    %v227 = vld [vmem:[#allocation5 + $0xc8] sm:$0xff]
    %v228 = vld [vmem:[#allocation5 + $0xd0] sm:$0xff]
    %v229 = vld [vmem:[#allocation5 + $0xd8] sm:$0xff]
    %v230 = vld [vmem:[#allocation5 + $0xe0] sm:$0xff]
    %v231 = vld [vmem:[#allocation5 + $0xe8] sm:$0xff]
    %v232 = vld [vmem:[#allocation5 + $0xf0] sm:$0xff]
    %v233 = vld [vmem:[#allocation5 + $0xf8] sm:$0xff]
    %v234 = vld [vmem:[#allocation5 + $0x100] sm:$0xff]
    %v235 = vld [vmem:[#allocation5 + $0x108] sm:$0xff]
    %v236 = vld [vmem:[#allocation5 + $0x110] sm:$0xff]
    %v237 = vld [vmem:[#allocation5 + $0x118] sm:$0xff]
    %v238 = vld [vmem:[#allocation5 + $0x120] sm:$0xff]
    %v239 = vld [vmem:[#allocation5 + $0x128] sm:$0xff]
    %v240 = vld [vmem:[#allocation5 + $0x130] sm:$0xff]
    %v241 = vld [vmem:[#allocation5 + $0x138] sm:$0xff]
    %v242 = vld [vmem:[#allocation5 + $0x140] sm:$0x11]
    %v243 = vld [vmem:[#allocation5 + $0x148] sm:$0x11]
    %v244 = vld [vmem:[#allocation5 + $0x150] sm:$0x11]
    %v245 = vld [vmem:[#allocation5 + $0x158] sm:$0x11]
    %v246 = vld [vmem:[#allocation5 + $0x160] sm:$0x11]
    %v247 = vld [vmem:[#allocation5 + $0x168] sm:$0x11]
    %v248 = vld [vmem:[#allocation5 + $0x170] sm:$0x11]
    %v249 = vld [vmem:[#allocation5 + $0x178] sm:$0x11]
    %v250 = vld [vmem:[#allocation5 + $0x180] sm:$0x11]
    %v251 = vld [vmem:[#allocation5 + $0x188] sm:$0x11]
    %v252 = vld [vmem:[#allocation5 + $0x190] sm:$0x11]
    %v253 = vld [vmem:[#allocation5 + $0x198] sm:$0x11]
    %v254 = vld [vmem:[#allocation5 + $0x1a0] sm:$0x11]
    %v255 = vld [vmem:[#allocation5 + $0x1a8] sm:$0x11]
    %v256 = vld [vmem:[#allocation5 + $0x1b0] sm:$0x11]
    %v257 = vld [vmem:[#allocation5 + $0x1b8] sm:$0x11]
    %v258 = vld [vmem:[#allocation5 + $0x1c0] sm:$0x11]
    %v259 = vld [vmem:[#allocation5 + $0x1c8] sm:$0x11]
    %v260 = vld [vmem:[#allocation5 + $0x1d0] sm:$0x11]
    %v261 = vld [vmem:[#allocation5 + $0x1d8] sm:$0x11]
    %v262 = vld [vmem:[#allocation5 + $0x1e0] sm:$0x11]
    %v263 = vld [vmem:[#allocation5 + $0x1e8] sm:$0x11]
    %v264 = vld [vmem:[#allocation5 + $0x1f0] sm:$0x11]
    %v265 = vld [vmem:[#allocation5 + $0x1f8] sm:$0x11]
    %v266 = vld [vmem:[#allocation5 + $0x200] sm:$0x11]
    %v267 = vld [vmem:[#allocation5 + $0x208] sm:$0x11]
    %v268 = vld [vmem:[#allocation5 + $0x210] sm:$0x11]
    %v269 = vld [vmem:[#allocation5 + $0x218] sm:$0x11]
    %v270 = vld [vmem:[#allocation5 + $0x220] sm:$0x11]
    %v271 = vld [vmem:[#allocation5 + $0x228] sm:$0x11]
    %v272 = vld [vmem:[#allocation5 + $0x230] sm:$0x11]
    %v273 = vld [vmem:[#allocation5 + $0x238] sm:$0x11]
    %v274 = vld [vmem:[#allocation5 + $0x240] sm:$0x11]
    %v275 = vld [vmem:[#allocation5 + $0x248] sm:$0x11]
    %v276 = vld [vmem:[#allocation5 + $0x250] sm:$0x11]
    %v277 = vld [vmem:[#allocation5 + $0x258] sm:$0x11]
    %v278 = vld [vmem:[#allocation5 + $0x260] sm:$0x11]
    %v279 = vld [vmem:[#allocation5 + $0x268] sm:$0x11]
    %v280 = vld [vmem:[#allocation5 + $0x270] sm:$0x11]
    %v281 = vld [vmem:[#allocation5 + $0x278] sm:$0x11]
    %v282 = vld [vmem:[%s2] sm:$0x1]
    %v284 = vlaneseq
    %v285 = vshrl.u32 %v284, 7
    %v286 = vsub.s32 0, %v285
    %v287 = vrot.slane %v282, %v286
    %v369 = vunpack.c.l.b16 %v202
    %v370 = vunpack.c.h.b16 %v202
    %v371 = vunpack.c.l.b16 %v203
    %v372 = vunpack.c.h.b16 %v203
    %v373 = vunpack.c.l.b16 %v204
    %v374 = vunpack.c.h.b16 %v204
    %v375 = vunpack.c.l.b16 %v205
    %v376 = vunpack.c.h.b16 %v205
    %v377 = vunpack.c.l.b16 %v206
    %v378 = vunpack.c.h.b16 %v206
    %v379 = vunpack.c.l.b16 %v207
    %v380 = vunpack.c.h.b16 %v207
    %v381 = vunpack.c.l.b16 %v208
    %v382 = vunpack.c.h.b16 %v208
    %v383 = vunpack.c.l.b16 %v209
    %v384 = vunpack.c.h.b16 %v209
    %v385 = vunpack.c.l.b16 %v210
    %v386 = vunpack.c.h.b16 %v210
    %v387 = vunpack.c.l.b16 %v211
    %v388 = vunpack.c.h.b16 %v211
    %v389 = vunpack.c.l.b16 %v212
    %v390 = vunpack.c.h.b16 %v212
    %v391 = vunpack.c.l.b16 %v213
    %v392 = vunpack.c.h.b16 %v213
    %v393 = vunpack.c.l.b16 %v214
    %v394 = vunpack.c.h.b16 %v214
    %v395 = vunpack.c.l.b16 %v215
    %v396 = vunpack.c.h.b16 %v215
    %v397 = vunpack.c.l.b16 %v216
    %v398 = vunpack.c.h.b16 %v216
    %v399 = vunpack.c.l.b16 %v217
    %v400 = vunpack.c.h.b16 %v217
    %v401 = vunpack.c.l.b16 %v218
    %v402 = vunpack.c.h.b16 %v218
    %v403 = vunpack.c.l.b16 %v219
    %v404 = vunpack.c.h.b16 %v219
    %v405 = vunpack.c.l.b16 %v220
    %v406 = vunpack.c.h.b16 %v220
    %v407 = vunpack.c.l.b16 %v221
    %v408 = vunpack.c.h.b16 %v221
    %v409 = vunpack.c.l.b16 %v222
    %v410 = vunpack.c.h.b16 %v222
    %v411 = vunpack.c.l.b16 %v223
    %v412 = vunpack.c.h.b16 %v223
    %v413 = vunpack.c.l.b16 %v224
    %v414 = vunpack.c.h.b16 %v224
    %v415 = vunpack.c.l.b16 %v225
    %v416 = vunpack.c.h.b16 %v225
    %v417 = vunpack.c.l.b16 %v226
    %v418 = vunpack.c.h.b16 %v226
    %v419 = vunpack.c.l.b16 %v227
    %v420 = vunpack.c.h.b16 %v227
    %v421 = vunpack.c.l.b16 %v228
    %v422 = vunpack.c.h.b16 %v228
    %v423 = vunpack.c.l.b16 %v229
    %v424 = vunpack.c.h.b16 %v229
    %v425 = vunpack.c.l.b16 %v230
    %v426 = vunpack.c.h.b16 %v230
    %v427 = vunpack.c.l.b16 %v231
    %v428 = vunpack.c.h.b16 %v231
    %v429 = vunpack.c.l.b16 %v232
    %v430 = vunpack.c.h.b16 %v232
    %v431 = vunpack.c.l.b16 %v233
    %v432 = vunpack.c.h.b16 %v233
    %v433 = vunpack.c.l.b16 %v234
    %v434 = vunpack.c.h.b16 %v234
    %v435 = vunpack.c.l.b16 %v235
    %v436 = vunpack.c.h.b16 %v235
    %v437 = vunpack.c.l.b16 %v236
    %v438 = vunpack.c.h.b16 %v236
    %v439 = vunpack.c.l.b16 %v237
    %v440 = vunpack.c.h.b16 %v237
    %v441 = vunpack.c.l.b16 %v238
    %v442 = vunpack.c.h.b16 %v238
    %v443 = vunpack.c.l.b16 %v239
    %v444 = vunpack.c.h.b16 %v239
    %v445 = vunpack.c.l.b16 %v240
    %v446 = vunpack.c.h.b16 %v240
    %v447 = vunpack.c.l.b16 %v241
    %v448 = vunpack.c.h.b16 %v241
    %v449 = vunpack.c.l.b16 %v242
    %v450 = vunpack.c.h.b16 %v242
    %v451 = vunpack.c.l.b16 %v243
    %v452 = vunpack.c.h.b16 %v243
    %v453 = vunpack.c.l.b16 %v244
    %v454 = vunpack.c.h.b16 %v244
    %v455 = vunpack.c.l.b16 %v245
    %v456 = vunpack.c.h.b16 %v245
    %v457 = vunpack.c.l.b16 %v246
    %v458 = vunpack.c.h.b16 %v246
    %v459 = vunpack.c.l.b16 %v247
    %v460 = vunpack.c.h.b16 %v247
    %v461 = vunpack.c.l.b16 %v248
    %v462 = vunpack.c.h.b16 %v248
    %v463 = vunpack.c.l.b16 %v249
    %v464 = vunpack.c.h.b16 %v249
    %v465 = vunpack.c.l.b16 %v250
    %v466 = vunpack.c.h.b16 %v250
    %v467 = vunpack.c.l.b16 %v251
    %v468 = vunpack.c.h.b16 %v251
    %v469 = vunpack.c.l.b16 %v252
    %v470 = vunpack.c.h.b16 %v252
    %v471 = vunpack.c.l.b16 %v253
    %v472 = vunpack.c.h.b16 %v253
    %v473 = vunpack.c.l.b16 %v254
    %v474 = vunpack.c.h.b16 %v254
    %v475 = vunpack.c.l.b16 %v255
    %v476 = vunpack.c.h.b16 %v255
    %v477 = vunpack.c.l.b16 %v256
    %v478 = vunpack.c.h.b16 %v256
    %v479 = vunpack.c.l.b16 %v257
    %v480 = vunpack.c.h.b16 %v257
    %v481 = vunpack.c.l.b16 %v258
    %v482 = vunpack.c.h.b16 %v258
    %v483 = vunpack.c.l.b16 %v259
    %v484 = vunpack.c.h.b16 %v259
    %v485 = vunpack.c.l.b16 %v260
    %v486 = vunpack.c.h.b16 %v260
    %v487 = vunpack.c.l.b16 %v261
    %v488 = vunpack.c.h.b16 %v261
    %v489 = vunpack.c.l.b16 %v262
    %v490 = vunpack.c.h.b16 %v262
    %v491 = vunpack.c.l.b16 %v263
    %v492 = vunpack.c.h.b16 %v263
    %v493 = vunpack.c.l.b16 %v264
    %v494 = vunpack.c.h.b16 %v264
    %v495 = vunpack.c.l.b16 %v265
    %v496 = vunpack.c.h.b16 %v265
    %v497 = vunpack.c.l.b16 %v266
    %v498 = vunpack.c.h.b16 %v266
    %v499 = vunpack.c.l.b16 %v267
    %v500 = vunpack.c.h.b16 %v267
    %v501 = vunpack.c.l.b16 %v268
    %v502 = vunpack.c.h.b16 %v268
    %v503 = vunpack.c.l.b16 %v269
    %v504 = vunpack.c.h.b16 %v269
    %v505 = vunpack.c.l.b16 %v270
    %v506 = vunpack.c.h.b16 %v270
    %v507 = vunpack.c.l.b16 %v271
    %v508 = vunpack.c.h.b16 %v271
    %v509 = vunpack.c.l.b16 %v272
    %v510 = vunpack.c.h.b16 %v272
    %v511 = vunpack.c.l.b16 %v273
    %v512 = vunpack.c.h.b16 %v273
    %v513 = vunpack.c.l.b16 %v274
    %v514 = vunpack.c.h.b16 %v274
    %v515 = vunpack.c.l.b16 %v275
    %v516 = vunpack.c.h.b16 %v275
    %v517 = vunpack.c.l.b16 %v276
    %v518 = vunpack.c.h.b16 %v276
    %v519 = vunpack.c.l.b16 %v277
    %v520 = vunpack.c.h.b16 %v277
    %v521 = vunpack.c.l.b16 %v278
    %v522 = vunpack.c.h.b16 %v278
    %v523 = vunpack.c.l.b16 %v279
    %v524 = vunpack.c.h.b16 %v279
    %v525 = vunpack.c.l.b16 %v280
    %v526 = vunpack.c.h.b16 %v280
    %v527 = vunpack.c.l.b16 %v281
    %v528 = vunpack.c.h.b16 %v281
    %v529 = vpack.c.b16 %v449, %v369
    %v530 = vpack.c.b16 %v450, %v370
    %v531 = vpack.c.b16 %v451, %v371
    %v532 = vpack.c.b16 %v452, %v372
    %v533 = vpack.c.b16 %v453, %v373
    %v534 = vpack.c.b16 %v454, %v374
    %v535 = vpack.c.b16 %v455, %v375
    %v536 = vpack.c.b16 %v456, %v376
    %v537 = vpack.c.b16 %v457, %v377
    %v538 = vpack.c.b16 %v458, %v378
    %v539 = vpack.c.b16 %v459, %v379
    %v540 = vpack.c.b16 %v460, %v380
    %v541 = vpack.c.b16 %v461, %v381
    %v542 = vpack.c.b16 %v462, %v382
    %v543 = vpack.c.b16 %v463, %v383
    %v544 = vpack.c.b16 %v464, %v384
    %v545 = vpack.c.b16 %v465, %v385
    %v546 = vpack.c.b16 %v466, %v386
    %v547 = vpack.c.b16 %v467, %v387
    %v548 = vpack.c.b16 %v468, %v388
    %v549 = vpack.c.b16 %v469, %v389
    %v550 = vpack.c.b16 %v470, %v390
    %v551 = vpack.c.b16 %v471, %v391
    %v552 = vpack.c.b16 %v472, %v392
    %v553 = vpack.c.b16 %v473, %v393
    %v554 = vpack.c.b16 %v474, %v394
    %v555 = vpack.c.b16 %v475, %v395
    %v556 = vpack.c.b16 %v476, %v396
    %v557 = vpack.c.b16 %v477, %v397
    %v558 = vpack.c.b16 %v478, %v398
    %v559 = vpack.c.b16 %v479, %v399
    %v560 = vpack.c.b16 %v480, %v400
    %v561 = vpack.c.b16 %v481, %v401
    %v562 = vpack.c.b16 %v482, %v402
    %v563 = vpack.c.b16 %v483, %v403
    %v564 = vpack.c.b16 %v484, %v404
    %v565 = vpack.c.b16 %v485, %v405
    %v566 = vpack.c.b16 %v486, %v406
    %v567 = vpack.c.b16 %v487, %v407
    %v568 = vpack.c.b16 %v488, %v408
    %v569 = vpack.c.b16 %v489, %v409
    %v570 = vpack.c.b16 %v490, %v410
    %v571 = vpack.c.b16 %v491, %v411
    %v572 = vpack.c.b16 %v492, %v412
    %v573 = vpack.c.b16 %v493, %v413
    %v574 = vpack.c.b16 %v494, %v414
    %v575 = vpack.c.b16 %v495, %v415
    %v576 = vpack.c.b16 %v496, %v416
    %v577 = vpack.c.b16 %v497, %v417
    %v578 = vpack.c.b16 %v498, %v418
    %v579 = vpack.c.b16 %v499, %v419
    %v580 = vpack.c.b16 %v500, %v420
    %v581 = vpack.c.b16 %v501, %v421
    %v582 = vpack.c.b16 %v502, %v422
    %v583 = vpack.c.b16 %v503, %v423
    %v584 = vpack.c.b16 %v504, %v424
    %v585 = vpack.c.b16 %v505, %v425
    %v586 = vpack.c.b16 %v506, %v426
    %v587 = vpack.c.b16 %v507, %v427
    %v588 = vpack.c.b16 %v508, %v428
    %v589 = vpack.c.b16 %v509, %v429
    %v590 = vpack.c.b16 %v510, %v430
    %v591 = vpack.c.b16 %v511, %v431
    %v592 = vpack.c.b16 %v512, %v432
    %v593 = vpack.c.b16 %v513, %v433
    %v594 = vpack.c.b16 %v514, %v434
    %v595 = vpack.c.b16 %v515, %v435
    %v596 = vpack.c.b16 %v516, %v436
    %v597 = vpack.c.b16 %v517, %v437
    %v598 = vpack.c.b16 %v518, %v438
    %v599 = vpack.c.b16 %v519, %v439
    %v600 = vpack.c.b16 %v520, %v440
    %v601 = vpack.c.b16 %v521, %v441
    %v602 = vpack.c.b16 %v522, %v442
    %v603 = vpack.c.b16 %v523, %v443
    %v604 = vpack.c.b16 %v524, %v444
    %v605 = vpack.c.b16 %v525, %v445
    %v606 = vpack.c.b16 %v526, %v446
    %v607 = vpack.c.b16 %v527, %v447
    %v608 = vpack.c.b16 %v528, %v448
    %689 = vmatprep.subr.bf16.mxu0 %v530
    %690 = vmatpush1.bf16.xpose.msra.mxu0 %v529
    %691 = vmatprep.subr.bf16.mxu0 0
    %692 = vmatpush1.bf16.xpose.msra.mxu0 0
    %693 = vmatprep.subr.bf16.mxu0 0
    %694 = vmatpush1.bf16.xpose.msra.mxu0 0
    %695 = vmatprep.subr.bf16.mxu0 0
    %696 = vmatpush1.bf16.xpose.msra.mxu0 0
    %697 = vmatprep.subr.bf16.mxu0 0
    %698 = vmatpush1.bf16.xpose.msra.mxu0 0
    %699 = vmatprep.subr.bf16.mxu0 0
    %700 = vmatpush1.bf16.xpose.msra.mxu0 0
    %701 = vmatprep.subr.bf16.mxu0 0
    %702 = vmatpush1.bf16.xpose.msra.mxu0 0
    %703 = vmatprep.subr.bf16.mxu0 0
    %704 = vmatpush1.bf16.xpose.msra.mxu0 0
    %705 = vmatprep.subr.bf16.mxu0 0
    %706 = vmatpush1.bf16.xpose.msra.mxu0 0
    %707 = vmatprep.subr.bf16.mxu0 0
    %708 = vmatpush1.bf16.xpose.msra.mxu0 0
    %709 = vmatprep.subr.bf16.mxu0 0
    %710 = vmatpush1.bf16.xpose.msra.mxu0 0
    %711 = vmatprep.subr.bf16.mxu0 0
    %712 = vmatpush1.bf16.xpose.msra.mxu0 0
    %713 = vmatprep.subr.bf16.mxu0 0
    %714 = vmatpush1.bf16.xpose.msra.mxu0 0
    %715 = vmatprep.subr.bf16.mxu0 0
    %716 = vmatpush1.bf16.xpose.msra.mxu0 0
    %717 = vmatprep.subr.bf16.mxu0 0
    %718 = vmatpush1.bf16.xpose.msra.mxu0 0
    %719 = vmatprep.subr.bf16.mxu0 0
    %720 = vmatpush1.bf16.xpose.msra.mxu0 0
    %721 = vmatprep.mubr.bf16.mxu0 %v123
    %722 = vmatmul.mubr.bf16.gmra.mrb[0].mxu0 %v122
    %v723 = vpop.f32.mrb[0].mxu0
    %v724 = vadd.f32 %v287, %v723
    %v725 = vpop.f32.mrb[0].mxu0
    %v726 = vpop.f32.mrb[0].mxu0
    %v727 = vpop.f32.mrb[0].mxu0
    %728 = vdwg.mxu0
    %729 = vmatprep.subr.bf16.mxu0 %v532
    %730 = vmatpush1.bf16.xpose.msra.mxu0 %v531
    %731 = vmatprep.subr.bf16.mxu0 0
    %732 = vmatpush1.bf16.xpose.msra.mxu0 0
    %733 = vmatprep.subr.bf16.mxu0 0
    %734 = vmatpush1.bf16.xpose.msra.mxu0 0
    %735 = vmatprep.subr.bf16.mxu0 0
    %736 = vmatpush1.bf16.xpose.msra.mxu0 0
    %737 = vmatprep.subr.bf16.mxu0 0
    %738 = vmatpush1.bf16.xpose.msra.mxu0 0
    %739 = vmatprep.subr.bf16.mxu0 0
    %740 = vmatpush1.bf16.xpose.msra.mxu0 0
    %741 = vmatprep.subr.bf16.mxu0 0
    %742 = vmatpush1.bf16.xpose.msra.mxu0 0
    %743 = vmatprep.subr.bf16.mxu0 0
    %744 = vmatpush1.bf16.xpose.msra.mxu0 0
    %745 = vmatprep.subr.bf16.mxu0 0
    %746 = vmatpush1.bf16.xpose.msra.mxu0 0
    %747 = vmatprep.subr.bf16.mxu0 0
    %748 = vmatpush1.bf16.xpose.msra.mxu0 0
    %749 = vmatprep.subr.bf16.mxu0 0
    %750 = vmatpush1.bf16.xpose.msra.mxu0 0
    %751 = vmatprep.subr.bf16.mxu0 0
    %752 = vmatpush1.bf16.xpose.msra.mxu0 0
    %753 = vmatprep.subr.bf16.mxu0 0
    %754 = vmatpush1.bf16.xpose.msra.mxu0 0
    %755 = vmatprep.subr.bf16.mxu0 0
    %756 = vmatpush1.bf16.xpose.msra.mxu0 0
    %757 = vmatprep.subr.bf16.mxu0 0
    %758 = vmatpush1.bf16.xpose.msra.mxu0 0
    %759 = vmatprep.subr.bf16.mxu0 0
    %760 = vmatpush1.bf16.xpose.msra.mxu0 0
    %761 = vmatprep.mubr.bf16.mxu0 %v125
    %762 = vmatmul.mubr.bf16.gmra.mrb[0].mxu0 %v124
    %v763 = vpop.f32.mrb[0].mxu0
    %v764 = vadd.f32 %v724, %v763
    %v765 = vpop.f32.mrb[0].mxu0
    %v766 = vpop.f32.mrb[0].mxu0
    %v767 = vpop.f32.mrb[0].mxu0
    %768 = vdwg.mxu0
    %769 = vmatprep.subr.bf16.mxu0 %v534
    %770 = vmatpush1.bf16.xpose.msra.mxu0 %v533
    %771 = vmatprep.subr.bf16.mxu0 0
    %772 = vmatpush1.bf16.xpose.msra.mxu0 0
    %773 = vmatprep.subr.bf16.mxu0 0
    %774 = vmatpush1.bf16.xpose.msra.mxu0 0
    %775 = vmatprep.subr.bf16.mxu0 0
    %776 = vmatpush1.bf16.xpose.msra.mxu0 0
    %777 = vmatprep.subr.bf16.mxu0 0
    %778 = vmatpush1.bf16.xpose.msra.mxu0 0
    %779 = vmatprep.subr.bf16.mxu0 0
    %780 = vmatpush1.bf16.xpose.msra.mxu0 0
    %781 = vmatprep.subr.bf16.mxu0 0
    %782 = vmatpush1.bf16.xpose.msra.mxu0 0
    %783 = vmatprep.subr.bf16.mxu0 0
    %784 = vmatpush1.bf16.xpose.msra.mxu0 0
    %785 = vmatprep.subr.bf16.mxu0 0
    %786 = vmatpush1.bf16.xpose.msra.mxu0 0
    %787 = vmatprep.subr.bf16.mxu0 0
    %788 = vmatpush1.bf16.xpose.msra.mxu0 0
    %789 = vmatprep.subr.bf16.mxu0 0
    %790 = vmatpush1.bf16.xpose.msra.mxu0 0
    %791 = vmatprep.subr.bf16.mxu0 0
    %792 = vmatpush1.bf16.xpose.msra.mxu0 0
    %793 = vmatprep.subr.bf16.mxu0 0
    %794 = vmatpush1.bf16.xpose.msra.mxu0 0
    %795 = vmatprep.subr.bf16.mxu0 0
    %796 = vmatpush1.bf16.xpose.msra.mxu0 0
    %797 = vmatprep.subr.bf16.mxu0 0
    %798 = vmatpush1.bf16.xpose.msra.mxu0 0
    %799 = vmatprep.subr.bf16.mxu0 0
    %800 = vmatpush1.bf16.xpose.msra.mxu0 0
    %801 = vmatprep.mubr.bf16.mxu0 %v127
    %802 = vmatmul.mubr.bf16.gmra.mrb[0].mxu0 %v126
    %v803 = vpop.f32.mrb[0].mxu0
    %v804 = vadd.f32 %v764, %v803
    %v805 = vpop.f32.mrb[0].mxu0
    %v806 = vpop.f32.mrb[0].mxu0
    %v807 = vpop.f32.mrb[0].mxu0
    %808 = vdwg.mxu0
    %809 = vmatprep.subr.bf16.mxu0 %v536
    %810 = vmatpush1.bf16.xpose.msra.mxu0 %v535
    %811 = vmatprep.subr.bf16.mxu0 0
    %812 = vmatpush1.bf16.xpose.msra.mxu0 0
    %813 = vmatprep.subr.bf16.mxu0 0
    %814 = vmatpush1.bf16.xpose.msra.mxu0 0
    %815 = vmatprep.subr.bf16.mxu0 0
    %816 = vmatpush1.bf16.xpose.msra.mxu0 0
    %817 = vmatprep.subr.bf16.mxu0 0
    %818 = vmatpush1.bf16.xpose.msra.mxu0 0
    %819 = vmatprep.subr.bf16.mxu0 0
    %820 = vmatpush1.bf16.xpose.msra.mxu0 0
    %821 = vmatprep.subr.bf16.mxu0 0
    %822 = vmatpush1.bf16.xpose.msra.mxu0 0
    %823 = vmatprep.subr.bf16.mxu0 0
    %824 = vmatpush1.bf16.xpose.msra.mxu0 0
    %825 = vmatprep.subr.bf16.mxu0 0
    %826 = vmatpush1.bf16.xpose.msra.mxu0 0
    %827 = vmatprep.subr.bf16.mxu0 0
    %828 = vmatpush1.bf16.xpose.msra.mxu0 0
    %829 = vmatprep.subr.bf16.mxu0 0
    %830 = vmatpush1.bf16.xpose.msra.mxu0 0
    %831 = vmatprep.subr.bf16.mxu0 0
    %832 = vmatpush1.bf16.xpose.msra.mxu0 0
    %833 = vmatprep.subr.bf16.mxu0 0
    %834 = vmatpush1.bf16.xpose.msra.mxu0 0
    %835 = vmatprep.subr.bf16.mxu0 0
    %836 = vmatpush1.bf16.xpose.msra.mxu0 0
    %837 = vmatprep.subr.bf16.mxu0 0
    %838 = vmatpush1.bf16.xpose.msra.mxu0 0
    %839 = vmatprep.subr.bf16.mxu0 0
    %840 = vmatpush1.bf16.xpose.msra.mxu0 0
    %841 = vmatprep.mubr.bf16.mxu0 %v129
    %842 = vmatmul.mubr.bf16.gmra.mrb[0].mxu0 %v128
    %v843 = vpop.f32.mrb[0].mxu0
    %v844 = vadd.f32 %v804, %v843
    %v845 = vpop.f32.mrb[0].mxu0
    %v846 = vpop.f32.mrb[0].mxu0
    %v847 = vpop.f32.mrb[0].mxu0
    %848 = vdwg.mxu0
    %849 = vmatprep.subr.bf16.mxu0 %v538
    %850 = vmatpush1.bf16.xpose.msra.mxu0 %v537
    %851 = vmatprep.subr.bf16.mxu0 0
    %852 = vmatpush1.bf16.xpose.msra.mxu0 0
    %853 = vmatprep.subr.bf16.mxu0 0
    %854 = vmatpush1.bf16.xpose.msra.mxu0 0
    %855 = vmatprep.subr.bf16.mxu0 0
    %856 = vmatpush1.bf16.xpose.msra.mxu0 0
    %857 = vmatprep.subr.bf16.mxu0 0
    %858 = vmatpush1.bf16.xpose.msra.mxu0 0
    %859 = vmatprep.subr.bf16.mxu0 0
    %860 = vmatpush1.bf16.xpose.msra.mxu0 0
    %861 = vmatprep.subr.bf16.mxu0 0
    %862 = vmatpush1.bf16.xpose.msra.mxu0 0
    %863 = vmatprep.subr.bf16.mxu0 0
    %864 = vmatpush1.bf16.xpose.msra.mxu0 0
    %865 = vmatprep.subr.bf16.mxu0 0
    %866 = vmatpush1.bf16.xpose.msra.mxu0 0
    %867 = vmatprep.subr.bf16.mxu0 0
    %868 = vmatpush1.bf16.xpose.msra.mxu0 0
    %869 = vmatprep.subr.bf16.mxu0 0
    %870 = vmatpush1.bf16.xpose.msra.mxu0 0
    %871 = vmatprep.subr.bf16.mxu0 0
    %872 = vmatpush1.bf16.xpose.msra.mxu0 0
    %873 = vmatprep.subr.bf16.mxu0 0
    %874 = vmatpush1.bf16.xpose.msra.mxu0 0
    %875 = vmatprep.subr.bf16.mxu0 0
    %876 = vmatpush1.bf16.xpose.msra.mxu0 0
    %877 = vmatprep.subr.bf16.mxu0 0
    %878 = vmatpush1.bf16.xpose.msra.mxu0 0
    %879 = vmatprep.subr.bf16.mxu0 0
    %880 = vmatpush1.bf16.xpose.msra.mxu0 0
    %881 = vmatprep.mubr.bf16.mxu0 %v131
    %882 = vmatmul.mubr.bf16.gmra.mrb[0].mxu0 %v130
    %v883 = vpop.f32.mrb[0].mxu0
    %v884 = vadd.f32 %v844, %v883
    %v885 = vpop.f32.mrb[0].mxu0
    %v886 = vpop.f32.mrb[0].mxu0
    %v887 = vpop.f32.mrb[0].mxu0
    %888 = vdwg.mxu0
    %889 = vmatprep.subr.bf16.mxu0 %v540
    %890 = vmatpush1.bf16.xpose.msra.mxu0 %v539
    %891 = vmatprep.subr.bf16.mxu0 0
    %892 = vmatpush1.bf16.xpose.msra.mxu0 0
    %893 = vmatprep.subr.bf16.mxu0 0
    %894 = vmatpush1.bf16.xpose.msra.mxu0 0
    %895 = vmatprep.subr.bf16.mxu0 0
    %896 = vmatpush1.bf16.xpose.msra.mxu0 0
    %897 = vmatprep.subr.bf16.mxu0 0
    %898 = vmatpush1.bf16.xpose.msra.mxu0 0
    %899 = vmatprep.subr.bf16.mxu0 0
    %900 = vmatpush1.bf16.xpose.msra.mxu0 0
    %901 = vmatprep.subr.bf16.mxu0 0
    %902 = vmatpush1.bf16.xpose.msra.mxu0 0
    %903 = vmatprep.subr.bf16.mxu0 0
    %904 = vmatpush1.bf16.xpose.msra.mxu0 0
    %905 = vmatprep.subr.bf16.mxu0 0
    %906 = vmatpush1.bf16.xpose.msra.mxu0 0
    %907 = vmatprep.subr.bf16.mxu0 0
    %908 = vmatpush1.bf16.xpose.msra.mxu0 0
    %909 = vmatprep.subr.bf16.mxu0 0
    %910 = vmatpush1.bf16.xpose.msra.mxu0 0
    %911 = vmatprep.subr.bf16.mxu0 0
    %912 = vmatpush1.bf16.xpose.msra.mxu0 0
    %913 = vmatprep.subr.bf16.mxu0 0
    %914 = vmatpush1.bf16.xpose.msra.mxu0 0
    %915 = vmatprep.subr.bf16.mxu0 0
    %916 = vmatpush1.bf16.xpose.msra.mxu0 0
    %917 = vmatprep.subr.bf16.mxu0 0
    %918 = vmatpush1.bf16.xpose.msra.mxu0 0
    %919 = vmatprep.subr.bf16.mxu0 0
    %920 = vmatpush1.bf16.xpose.msra.mxu0 0
    %921 = vmatprep.mubr.bf16.mxu0 %v133
    %922 = vmatmul.mubr.bf16.gmra.mrb[0].mxu0 %v132
    %v923 = vpop.f32.mrb[0].mxu0
    %v924 = vadd.f32 %v884, %v923
    %v925 = vpop.f32.mrb[0].mxu0
    %v926 = vpop.f32.mrb[0].mxu0
    %v927 = vpop.f32.mrb[0].mxu0
    %928 = vdwg.mxu0
    %929 = vmatprep.subr.bf16.mxu0 %v542
    %930 = vmatpush1.bf16.xpose.msra.mxu0 %v541
    %931 = vmatprep.subr.bf16.mxu0 0
    %932 = vmatpush1.bf16.xpose.msra.mxu0 0
    %933 = vmatprep.subr.bf16.mxu0 0
    %934 = vmatpush1.bf16.xpose.msra.mxu0 0
    %935 = vmatprep.subr.bf16.mxu0 0
    %936 = vmatpush1.bf16.xpose.msra.mxu0 0
    %937 = vmatprep.subr.bf16.mxu0 0
    %938 = vmatpush1.bf16.xpose.msra.mxu0 0
    %939 = vmatprep.subr.bf16.mxu0 0
    %940 = vmatpush1.bf16.xpose.msra.mxu0 0
    %941 = vmatprep.subr.bf16.mxu0 0
    %942 = vmatpush1.bf16.xpose.msra.mxu0 0
    %943 = vmatprep.subr.bf16.mxu0 0
    %944 = vmatpush1.bf16.xpose.msra.mxu0 0
    %945 = vmatprep.subr.bf16.mxu0 0
    %946 = vmatpush1.bf16.xpose.msra.mxu0 0
    %947 = vmatprep.subr.bf16.mxu0 0
    %948 = vmatpush1.bf16.xpose.msra.mxu0 0
    %949 = vmatprep.subr.bf16.mxu0 0
    %950 = vmatpush1.bf16.xpose.msra.mxu0 0
    %951 = vmatprep.subr.bf16.mxu0 0
    %952 = vmatpush1.bf16.xpose.msra.mxu0 0
    %953 = vmatprep.subr.bf16.mxu0 0
    %954 = vmatpush1.bf16.xpose.msra.mxu0 0
    %955 = vmatprep.subr.bf16.mxu0 0
    %956 = vmatpush1.bf16.xpose.msra.mxu0 0
    %957 = vmatprep.subr.bf16.mxu0 0
    %958 = vmatpush1.bf16.xpose.msra.mxu0 0
    %959 = vmatprep.subr.bf16.mxu0 0
    %960 = vmatpush1.bf16.xpose.msra.mxu0 0
    %961 = vmatprep.mubr.bf16.mxu0 %v135
    %962 = vmatmul.mubr.bf16.gmra.mrb[0].mxu0 %v134
    %v963 = vpop.f32.mrb[0].mxu0
    %v964 = vadd.f32 %v924, %v963
    %v965 = vpop.f32.mrb[0].mxu0
    %v966 = vpop.f32.mrb[0].mxu0
    %v967 = vpop.f32.mrb[0].mxu0
    %968 = vdwg.mxu0
    %969 = vmatprep.subr.bf16.mxu0 %v544
    %970 = vmatpush1.bf16.xpose.msra.mxu0 %v543
    %971 = vmatprep.subr.bf16.mxu0 0
    %972 = vmatpush1.bf16.xpose.msra.mxu0 0
    %973 = vmatprep.subr.bf16.mxu0 0
    %974 = vmatpush1.bf16.xpose.msra.mxu0 0
    %975 = vmatprep.subr.bf16.mxu0 0
    %976 = vmatpush1.bf16.xpose.msra.mxu0 0
    %977 = vmatprep.subr.bf16.mxu0 0
    %978 = vmatpush1.bf16.xpose.msra.mxu0 0
    %979 = vmatprep.subr.bf16.mxu0 0
    %980 = vmatpush1.bf16.xpose.msra.mxu0 0
    %981 = vmatprep.subr.bf16.mxu0 0
    %982 = vmatpush1.bf16.xpose.msra.mxu0 0
    %983 = vmatprep.subr.bf16.mxu0 0
    %984 = vmatpush1.bf16.xpose.msra.mxu0 0
    %985 = vmatprep.subr.bf16.mxu0 0
    %986 = vmatpush1.bf16.xpose.msra.mxu0 0
    %987 = vmatprep.subr.bf16.mxu0 0
    %988 = vmatpush1.bf16.xpose.msra.mxu0 0
    %989 = vmatprep.subr.bf16.mxu0 0
    %990 = vmatpush1.bf16.xpose.msra.mxu0 0
    %991 = vmatprep.subr.bf16.mxu0 0
    %992 = vmatpush1.bf16.xpose.msra.mxu0 0
    %993 = vmatprep.subr.bf16.mxu0 0
    %994 = vmatpush1.bf16.xpose.msra.mxu0 0
    %995 = vmatprep.subr.bf16.mxu0 0
    %996 = vmatpush1.bf16.xpose.msra.mxu0 0
    %997 = vmatprep.subr.bf16.mxu0 0
    %998 = vmatpush1.bf16.xpose.msra.mxu0 0
    %999 = vmatprep.subr.bf16.mxu0 0
    %1000 = vmatpush1.bf16.xpose.msra.mxu0 0
    %1001 = vmatprep.mubr.bf16.mxu0 %v137
    %1002 = vmatmul.mubr.bf16.gmra.mrb[0].mxu0 %v136
    %v1003 = vpop.f32.mrb[0].mxu0
    %v1004 = vadd.f32 %v964, %v1003
    %v1005 = vpop.f32.mrb[0].mxu0
    %v1006 = vpop.f32.mrb[0].mxu0
    %v1007 = vpop.f32.mrb[0].mxu0
    %1008 = vdwg.mxu0
    %1009 = vmatprep.subr.bf16.mxu0 %v546
    %1010 = vmatpush1.bf16.xpose.msra.mxu0 %v545
    %1011 = vmatprep.subr.bf16.mxu0 0
    %1012 = vmatpush1.bf16.xpose.msra.mxu0 0
    %1013 = vmatprep.subr.bf16.mxu0 0
    %1014 = vmatpush1.bf16.xpose.msra.mxu0 0
    %1015 = vmatprep.subr.bf16.mxu0 0
    %1016 = vmatpush1.bf16.xpose.msra.mxu0 0
    %1017 = vmatprep.subr.bf16.mxu0 0
    %1018 = vmatpush1.bf16.xpose.msra.mxu0 0
    %1019 = vmatprep.subr.bf16.mxu0 0
    %1020 = vmatpush1.bf16.xpose.msra.mxu0 0
    %1021 = vmatprep.subr.bf16.mxu0 0
    %1022 = vmatpush1.bf16.xpose.msra.mxu0 0
    %1023 = vmatprep.subr.bf16.mxu0 0
    %1024 = vmatpush1.bf16.xpose.msra.mxu0 0
    %1025 = vmatprep.subr.bf16.mxu0 0
    %1026 = vmatpush1.bf16.xpose.msra.mxu0 0
    %1027 = vmatprep.subr.bf16.mxu0 0
    %1028 = vmatpush1.bf16.xpose.msra.mxu0 0
    %1029 = vmatprep.subr.bf16.mxu0 0
    %1030 = vmatpush1.bf16.xpose.msra.mxu0 0
    %1031 = vmatprep.subr.bf16.mxu0 0
    %1032 = vmatpush1.bf16.xpose.msra.mxu0 0
    %1033 = vmatprep.subr.bf16.mxu0 0
    %1034 = vmatpush1.bf16.xpose.msra.mxu0 0
    %1035 = vmatprep.subr.bf16.mxu0 0
    %1036 = vmatpush1.bf16.xpose.msra.mxu0 0
    %1037 = vmatprep.subr.bf16.mxu0 0
    %1038 = vmatpush1.bf16.xpose.msra.mxu0 0
    %1039 = vmatprep.subr.bf16.mxu0 0
    %1040 = vmatpush1.bf16.xpose.msra.mxu0 0
    %1041 = vmatprep.mubr.bf16.mxu0 %v139
    %1042 = vmatmul.mubr.bf16.gmra.mrb[0].mxu0 %v138
    %v1043 = vpop.f32.mrb[0].mxu0
    %v1044 = vadd.f32 %v1004, %v1043
    %v1045 = vpop.f32.mrb[0].mxu0
    %v1046 = vpop.f32.mrb[0].mxu0
    %v1047 = vpop.f32.mrb[0].mxu0
    %1048 = vdwg.mxu0
    %1049 = vmatprep.subr.bf16.mxu0 %v548
    %1050 = vmatpush1.bf16.xpose.msra.mxu0 %v547
    %1051 = vmatprep.subr.bf16.mxu0 0
    %1052 = vmatpush1.bf16.xpose.msra.mxu0 0
    %1053 = vmatprep.subr.bf16.mxu0 0
    %1054 = vmatpush1.bf16.xpose.msra.mxu0 0
    %1055 = vmatprep.subr.bf16.mxu0 0
    %1056 = vmatpush1.bf16.xpose.msra.mxu0 0
    %1057 = vmatprep.subr.bf16.mxu0 0
    %1058 = vmatpush1.bf16.xpose.msra.mxu0 0
    %1059 = vmatprep.subr.bf16.mxu0 0
    %1060 = vmatpush1.bf16.xpose.msra.mxu0 0
    %1061 = vmatprep.subr.bf16.mxu0 0
    %1062 = vmatpush1.bf16.xpose.msra.mxu0 0
    %1063 = vmatprep.subr.bf16.mxu0 0
    %1064 = vmatpush1.bf16.xpose.msra.mxu0 0
    %1065 = vmatprep.subr.bf16.mxu0 0
    %1066 = vmatpush1.bf16.xpose.msra.mxu0 0
    %1067 = vmatprep.subr.bf16.mxu0 0
    %1068 = vmatpush1.bf16.xpose.msra.mxu0 0
    %1069 = vmatprep.subr.bf16.mxu0 0
    %1070 = vmatpush1.bf16.xpose.msra.mxu0 0
    %1071 = vmatprep.subr.bf16.mxu0 0
    %1072 = vmatpush1.bf16.xpose.msra.mxu0 0
    %1073 = vmatprep.subr.bf16.mxu0 0
    %1074 = vmatpush1.bf16.xpose.msra.mxu0 0
    %1075 = vmatprep.subr.bf16.mxu0 0
    %1076 = vmatpush1.bf16.xpose.msra.mxu0 0
    %1077 = vmatprep.subr.bf16.mxu0 0
    %1078 = vmatpush1.bf16.xpose.msra.mxu0 0
    %1079 = vmatprep.subr.bf16.mxu0 0
    %1080 = vmatpush1.bf16.xpose.msra.mxu0 0
    %1081 = vmatprep.mubr.bf16.mxu0 %v141
    %1082 = vmatmul.mubr.bf16.gmra.mrb[0].mxu0 %v140
    %v1083 = vpop.f32.mrb[0].mxu0
    %v1084 = vadd.f32 %v1044, %v1083
    %v1085 = vpop.f32.mrb[0].mxu0
    %v1086 = vpop.f32.mrb[0].mxu0
    %v1087 = vpop.f32.mrb[0].mxu0
    %1088 = vdwg.mxu0
    %1089 = vmatprep.subr.bf16.mxu0 %v550
    %1090 = vmatpush1.bf16.xpose.msra.mxu0 %v549
    %1091 = vmatprep.subr.bf16.mxu0 0
    %1092 = vmatpush1.bf16.xpose.msra.mxu0 0
    %1093 = vmatprep.subr.bf16.mxu0 0
    %1094 = vmatpush1.bf16.xpose.msra.mxu0 0
    %1095 = vmatprep.subr.bf16.mxu0 0
    %1096 = vmatpush1.bf16.xpose.msra.mxu0 0
    %1097 = vmatprep.subr.bf16.mxu0 0
    %1098 = vmatpush1.bf16.xpose.msra.mxu0 0
    %1099 = vmatprep.subr.bf16.mxu0 0
    %1100 = vmatpush1.bf16.xpose.msra.mxu0 0
    %1101 = vmatprep.subr.bf16.mxu0 0
    %1102 = vmatpush1.bf16.xpose.msra.mxu0 0
    %1103 = vmatprep.subr.bf16.mxu0 0
    %1104 = vmatpush1.bf16.xpose.msra.mxu0 0
    %1105 = vmatprep.subr.bf16.mxu0 0
    %1106 = vmatpush1.bf16.xpose.msra.mxu0 0
    %1107 = vmatprep.subr.bf16.mxu0 0
    %1108 = vmatpush1.bf16.xpose.msra.mxu0 0
    %1109 = vmatprep.subr.bf16.mxu0 0
    %1110 = vmatpush1.bf16.xpose.msra.mxu0 0
    %1111 = vmatprep.subr.bf16.mxu0 0
    %1112 = vmatpush1.bf16.xpose.msra.mxu0 0
    %1113 = vmatprep.subr.bf16.mxu0 0
    %1114 = vmatpush1.bf16.xpose.msra.mxu0 0
    %1115 = vmatprep.subr.bf16.mxu0 0
    %1116 = vmatpush1.bf16.xpose.msra.mxu0 0
    %1117 = vmatprep.subr.bf16.mxu0 0
    %1118 = vmatpush1.bf16.xpose.msra.mxu0 0
    %1119 = vmatprep.subr.bf16.mxu0 0
    %1120 = vmatpush1.bf16.xpose.msra.mxu0 0
    %1121 = vmatprep.mubr.bf16.mxu0 %v143
    %1122 = vmatmul.mubr.bf16.gmra.mrb[0].mxu0 %v142
    %v1123 = vpop.f32.mrb[0].mxu0
    %v1124 = vadd.f32 %v1084, %v1123
    %v1125 = vpop.f32.mrb[0].mxu0
    %v1126 = vpop.f32.mrb[0].mxu0
    %v1127 = vpop.f32.mrb[0].mxu0
    %1128 = vdwg.mxu0
    %1129 = vmatprep.subr.bf16.mxu0 %v552
    %1130 = vmatpush1.bf16.xpose.msra.mxu0 %v551
    %1131 = vmatprep.subr.bf16.mxu0 0
    %1132 = vmatpush1.bf16.xpose.msra.mxu0 0
    %1133 = vmatprep.subr.bf16.mxu0 0
    %1134 = vmatpush1.bf16.xpose.msra.mxu0 0
    %1135 = vmatprep.subr.bf16.mxu0 0
    %1136 = vmatpush1.bf16.xpose.msra.mxu0 0
    %1137 = vmatprep.subr.bf16.mxu0 0
    %1138 = vmatpush1.bf16.xpose.msra.mxu0 0
    %1139 = vmatprep.subr.bf16.mxu0 0
    %1140 = vmatpush1.bf16.xpose.msra.mxu0 0
    %1141 = vmatprep.subr.bf16.mxu0 0
    %1142 = vmatpush1.bf16.xpose.msra.mxu0 0
    %1143 = vmatprep.subr.bf16.mxu0 0
    %1144 = vmatpush1.bf16.xpose.msra.mxu0 0
    %1145 = vmatprep.subr.bf16.mxu0 0
    %1146 = vmatpush1.bf16.xpose.msra.mxu0 0
    %1147 = vmatprep.subr.bf16.mxu0 0
    %1148 = vmatpush1.bf16.xpose.msra.mxu0 0
    %1149 = vmatprep.subr.bf16.mxu0 0
    %1150 = vmatpush1.bf16.xpose.msra.mxu0 0
    %1151 = vmatprep.subr.bf16.mxu0 0
    %1152 = vmatpush1.bf16.xpose.msra.mxu0 0
    %1153 = vmatprep.subr.bf16.mxu0 0
    %1154 = vmatpush1.bf16.xpose.msra.mxu0 0
    %1155 = vmatprep.subr.bf16.mxu0 0
    %1156 = vmatpush1.bf16.xpose.msra.mxu0 0
    %1157 = vmatprep.subr.bf16.mxu0 0
    %1158 = vmatpush1.bf16.xpose.msra.mxu0 0
    %1159 = vmatprep.subr.bf16.mxu0 0
    %1160 = vmatpush1.bf16.xpose.msra.mxu0 0
    %1161 = vmatprep.mubr.bf16.mxu0 %v145
    %1162 = vmatmul.mubr.bf16.gmra.mrb[0].mxu0 %v144
    %v1163 = vpop.f32.mrb[0].mxu0
    %v1164 = vadd.f32 %v1124, %v1163
    %v1165 = vpop.f32.mrb[0].mxu0
    %v1166 = vpop.f32.mrb[0].mxu0
    %v1167 = vpop.f32.mrb[0].mxu0
    %1168 = vdwg.mxu0
    %1169 = vmatprep.subr.bf16.mxu0 %v554
    %1170 = vmatpush1.bf16.xpose.msra.mxu0 %v553
    %1171 = vmatprep.subr.bf16.mxu0 0
    %1172 = vmatpush1.bf16.xpose.msra.mxu0 0
    %1173 = vmatprep.subr.bf16.mxu0 0
    %1174 = vmatpush1.bf16.xpose.msra.mxu0 0
    %1175 = vmatprep.subr.bf16.mxu0 0
    %1176 = vmatpush1.bf16.xpose.msra.mxu0 0
    %1177 = vmatprep.subr.bf16.mxu0 0
    %1178 = vmatpush1.bf16.xpose.msra.mxu0 0
    %1179 = vmatprep.subr.bf16.mxu0 0
    %1180 = vmatpush1.bf16.xpose.msra.mxu0 0
    %1181 = vmatprep.subr.bf16.mxu0 0
    %1182 = vmatpush1.bf16.xpose.msra.mxu0 0
    %1183 = vmatprep.subr.bf16.mxu0 0
    %1184 = vmatpush1.bf16.xpose.msra.mxu0 0
    %1185 = vmatprep.subr.bf16.mxu0 0
    %1186 = vmatpush1.bf16.xpose.msra.mxu0 0
    %1187 = vmatprep.subr.bf16.mxu0 0
    %1188 = vmatpush1.bf16.xpose.msra.mxu0 0
    %1189 = vmatprep.subr.bf16.mxu0 0
    %1190 = vmatpush1.bf16.xpose.msra.mxu0 0
    %1191 = vmatprep.subr.bf16.mxu0 0
    %1192 = vmatpush1.bf16.xpose.msra.mxu0 0
    %1193 = vmatprep.subr.bf16.mxu0 0
    %1194 = vmatpush1.bf16.xpose.msra.mxu0 0
    %1195 = vmatprep.subr.bf16.mxu0 0
    %1196 = vmatpush1.bf16.xpose.msra.mxu0 0
    %1197 = vmatprep.subr.bf16.mxu0 0
    %1198 = vmatpush1.bf16.xpose.msra.mxu0 0
    %1199 = vmatprep.subr.bf16.mxu0 0
    %1200 = vmatpush1.bf16.xpose.msra.mxu0 0
    %1201 = vmatprep.mubr.bf16.mxu0 %v147
    %1202 = vmatmul.mubr.bf16.gmra.mrb[0].mxu0 %v146
    %v1203 = vpop.f32.mrb[0].mxu0
    %v1204 = vadd.f32 %v1164, %v1203
    %v1205 = vpop.f32.mrb[0].mxu0
    %v1206 = vpop.f32.mrb[0].mxu0
    %v1207 = vpop.f32.mrb[0].mxu0
    %1208 = vdwg.mxu0
    %1209 = vmatprep.subr.bf16.mxu0 %v556
    %1210 = vmatpush1.bf16.xpose.msra.mxu0 %v555
    %1211 = vmatprep.subr.bf16.mxu0 0
    %1212 = vmatpush1.bf16.xpose.msra.mxu0 0
    %1213 = vmatprep.subr.bf16.mxu0 0
    %1214 = vmatpush1.bf16.xpose.msra.mxu0 0
    %1215 = vmatprep.subr.bf16.mxu0 0
    %1216 = vmatpush1.bf16.xpose.msra.mxu0 0
    %1217 = vmatprep.subr.bf16.mxu0 0
    %1218 = vmatpush1.bf16.xpose.msra.mxu0 0
    %1219 = vmatprep.subr.bf16.mxu0 0
    %1220 = vmatpush1.bf16.xpose.msra.mxu0 0
    %1221 = vmatprep.subr.bf16.mxu0 0
    %1222 = vmatpush1.bf16.xpose.msra.mxu0 0
    %1223 = vmatprep.subr.bf16.mxu0 0
    %1224 = vmatpush1.bf16.xpose.msra.mxu0 0
    %1225 = vmatprep.subr.bf16.mxu0 0
    %1226 = vmatpush1.bf16.xpose.msra.mxu0 0
    %1227 = vmatprep.subr.bf16.mxu0 0
    %1228 = vmatpush1.bf16.xpose.msra.mxu0 0
    %1229 = vmatprep.subr.bf16.mxu0 0
    %1230 = vmatpush1.bf16.xpose.msra.mxu0 0
    %1231 = vmatprep.subr.bf16.mxu0 0
    %1232 = vmatpush1.bf16.xpose.msra.mxu0 0
    %1233 = vmatprep.subr.bf16.mxu0 0
    %1234 = vmatpush1.bf16.xpose.msra.mxu0 0
    %1235 = vmatprep.subr.bf16.mxu0 0
    %1236 = vmatpush1.bf16.xpose.msra.mxu0 0
    %1237 = vmatprep.subr.bf16.mxu0 0
    %1238 = vmatpush1.bf16.xpose.msra.mxu0 0
    %1239 = vmatprep.subr.bf16.mxu0 0
    %1240 = vmatpush1.bf16.xpose.msra.mxu0 0
    %1241 = vmatprep.mubr.bf16.mxu0 %v149
    %1242 = vmatmul.mubr.bf16.gmra.mrb[0].mxu0 %v148
    %v1243 = vpop.f32.mrb[0].mxu0
    %v1244 = vadd.f32 %v1204, %v1243
    %v1245 = vpop.f32.mrb[0].mxu0
    %v1246 = vpop.f32.mrb[0].mxu0
    %v1247 = vpop.f32.mrb[0].mxu0
    %1248 = vdwg.mxu0
    %1249 = vmatprep.subr.bf16.mxu0 %v558
    %1250 = vmatpush1.bf16.xpose.msra.mxu0 %v557
    %1251 = vmatprep.subr.bf16.mxu0 0
    %1252 = vmatpush1.bf16.xpose.msra.mxu0 0
    %1253 = vmatprep.subr.bf16.mxu0 0
    %1254 = vmatpush1.bf16.xpose.msra.mxu0 0
    %1255 = vmatprep.subr.bf16.mxu0 0
    %1256 = vmatpush1.bf16.xpose.msra.mxu0 0
    %1257 = vmatprep.subr.bf16.mxu0 0
    %1258 = vmatpush1.bf16.xpose.msra.mxu0 0
    %1259 = vmatprep.subr.bf16.mxu0 0
    %1260 = vmatpush1.bf16.xpose.msra.mxu0 0
    %1261 = vmatprep.subr.bf16.mxu0 0
    %1262 = vmatpush1.bf16.xpose.msra.mxu0 0
    %1263 = vmatprep.subr.bf16.mxu0 0
    %1264 = vmatpush1.bf16.xpose.msra.mxu0 0
    %1265 = vmatprep.subr.bf16.mxu0 0
    %1266 = vmatpush1.bf16.xpose.msra.mxu0 0
    %1267 = vmatprep.subr.bf16.mxu0 0
    %1268 = vmatpush1.bf16.xpose.msra.mxu0 0
    %1269 = vmatprep.subr.bf16.mxu0 0
    %1270 = vmatpush1.bf16.xpose.msra.mxu0 0
    %1271 = vmatprep.subr.bf16.mxu0 0
    %1272 = vmatpush1.bf16.xpose.msra.mxu0 0
    %1273 = vmatprep.subr.bf16.mxu0 0
    %1274 = vmatpush1.bf16.xpose.msra.mxu0 0
    %1275 = vmatprep.subr.bf16.mxu0 0
    %1276 = vmatpush1.bf16.xpose.msra.mxu0 0
    %1277 = vmatprep.subr.bf16.mxu0 0
    %1278 = vmatpush1.bf16.xpose.msra.mxu0 0
    %1279 = vmatprep.subr.bf16.mxu0 0
    %1280 = vmatpush1.bf16.xpose.msra.mxu0 0
    %1281 = vmatprep.mubr.bf16.mxu0 %v151
    %1282 = vmatmul.mubr.bf16.gmra.mrb[0].mxu0 %v150
    %v1283 = vpop.f32.mrb[0].mxu0
    %v1284 = vadd.f32 %v1244, %v1283
    %v1285 = vpop.f32.mrb[0].mxu0
    %v1286 = vpop.f32.mrb[0].mxu0
    %v1287 = vpop.f32.mrb[0].mxu0
    %1288 = vdwg.mxu0
    %1289 = vmatprep.subr.bf16.mxu0 %v560
    %1290 = vmatpush1.bf16.xpose.msra.mxu0 %v559
    %1291 = vmatprep.subr.bf16.mxu0 0
    %1292 = vmatpush1.bf16.xpose.msra.mxu0 0
    %1293 = vmatprep.subr.bf16.mxu0 0
    %1294 = vmatpush1.bf16.xpose.msra.mxu0 0
    %1295 = vmatprep.subr.bf16.mxu0 0
    %1296 = vmatpush1.bf16.xpose.msra.mxu0 0
    %1297 = vmatprep.subr.bf16.mxu0 0
    %1298 = vmatpush1.bf16.xpose.msra.mxu0 0
    %1299 = vmatprep.subr.bf16.mxu0 0
    %1300 = vmatpush1.bf16.xpose.msra.mxu0 0
    %1301 = vmatprep.subr.bf16.mxu0 0
    %1302 = vmatpush1.bf16.xpose.msra.mxu0 0
    %1303 = vmatprep.subr.bf16.mxu0 0
    %1304 = vmatpush1.bf16.xpose.msra.mxu0 0
    %1305 = vmatprep.subr.bf16.mxu0 0
    %1306 = vmatpush1.bf16.xpose.msra.mxu0 0
    %1307 = vmatprep.subr.bf16.mxu0 0
    %1308 = vmatpush1.bf16.xpose.msra.mxu0 0
    %1309 = vmatprep.subr.bf16.mxu0 0
    %1310 = vmatpush1.bf16.xpose.msra.mxu0 0
    %1311 = vmatprep.subr.bf16.mxu0 0
    %1312 = vmatpush1.bf16.xpose.msra.mxu0 0
    %1313 = vmatprep.subr.bf16.mxu0 0
    %1314 = vmatpush1.bf16.xpose.msra.mxu0 0
    %1315 = vmatprep.subr.bf16.mxu0 0
    %1316 = vmatpush1.bf16.xpose.msra.mxu0 0
    %1317 = vmatprep.subr.bf16.mxu0 0
    %1318 = vmatpush1.bf16.xpose.msra.mxu0 0
    %1319 = vmatprep.subr.bf16.mxu0 0
    %1320 = vmatpush1.bf16.xpose.msra.mxu0 0
    %1321 = vmatprep.mubr.bf16.mxu0 %v153
    %1322 = vmatmul.mubr.bf16.gmra.mrb[0].mxu0 %v152
    %v1323 = vpop.f32.mrb[0].mxu0
    %v1324 = vadd.f32 %v1284, %v1323
    %v1325 = vpop.f32.mrb[0].mxu0
    %v1326 = vpop.f32.mrb[0].mxu0
    %v1327 = vpop.f32.mrb[0].mxu0
    %1328 = vdwg.mxu0
    %1329 = vmatprep.subr.bf16.mxu0 %v562
    %1330 = vmatpush1.bf16.xpose.msra.mxu0 %v561
    %1331 = vmatprep.subr.bf16.mxu0 0
    %1332 = vmatpush1.bf16.xpose.msra.mxu0 0
    %1333 = vmatprep.subr.bf16.mxu0 0
    %1334 = vmatpush1.bf16.xpose.msra.mxu0 0
    %1335 = vmatprep.subr.bf16.mxu0 0
    %1336 = vmatpush1.bf16.xpose.msra.mxu0 0
    %1337 = vmatprep.subr.bf16.mxu0 0
    %1338 = vmatpush1.bf16.xpose.msra.mxu0 0
    %1339 = vmatprep.subr.bf16.mxu0 0
    %1340 = vmatpush1.bf16.xpose.msra.mxu0 0
    %1341 = vmatprep.subr.bf16.mxu0 0
    %1342 = vmatpush1.bf16.xpose.msra.mxu0 0
    %1343 = vmatprep.subr.bf16.mxu0 0
    %1344 = vmatpush1.bf16.xpose.msra.mxu0 0
    %1345 = vmatprep.subr.bf16.mxu0 0
    %1346 = vmatpush1.bf16.xpose.msra.mxu0 0
    %1347 = vmatprep.subr.bf16.mxu0 0
    %1348 = vmatpush1.bf16.xpose.msra.mxu0 0
    %1349 = vmatprep.subr.bf16.mxu0 0
    %1350 = vmatpush1.bf16.xpose.msra.mxu0 0
    %1351 = vmatprep.subr.bf16.mxu0 0
    %1352 = vmatpush1.bf16.xpose.msra.mxu0 0
    %1353 = vmatprep.subr.bf16.mxu0 0
    %1354 = vmatpush1.bf16.xpose.msra.mxu0 0
    %1355 = vmatprep.subr.bf16.mxu0 0
    %1356 = vmatpush1.bf16.xpose.msra.mxu0 0
    %1357 = vmatprep.subr.bf16.mxu0 0
    %1358 = vmatpush1.bf16.xpose.msra.mxu0 0
    %1359 = vmatprep.subr.bf16.mxu0 0
    %1360 = vmatpush1.bf16.xpose.msra.mxu0 0
    %1361 = vmatprep.mubr.bf16.mxu0 %v155
    %1362 = vmatmul.mubr.bf16.gmra.mrb[0].mxu0 %v154
    %v1363 = vpop.f32.mrb[0].mxu0
    %v1364 = vadd.f32 %v1324, %v1363
    %v1365 = vpop.f32.mrb[0].mxu0
    %v1366 = vpop.f32.mrb[0].mxu0
    %v1367 = vpop.f32.mrb[0].mxu0
    %1368 = vdwg.mxu0
    %1369 = vmatprep.subr.bf16.mxu0 %v564
    %1370 = vmatpush1.bf16.xpose.msra.mxu0 %v563
    %1371 = vmatprep.subr.bf16.mxu0 0
    %1372 = vmatpush1.bf16.xpose.msra.mxu0 0
    %1373 = vmatprep.subr.bf16.mxu0 0
    %1374 = vmatpush1.bf16.xpose.msra.mxu0 0
    %1375 = vmatprep.subr.bf16.mxu0 0
    %1376 = vmatpush1.bf16.xpose.msra.mxu0 0
    %1377 = vmatprep.subr.bf16.mxu0 0
    %1378 = vmatpush1.bf16.xpose.msra.mxu0 0
    %1379 = vmatprep.subr.bf16.mxu0 0
    %1380 = vmatpush1.bf16.xpose.msra.mxu0 0
    %1381 = vmatprep.subr.bf16.mxu0 0
    %1382 = vmatpush1.bf16.xpose.msra.mxu0 0
    %1383 = vmatprep.subr.bf16.mxu0 0
    %1384 = vmatpush1.bf16.xpose.msra.mxu0 0
    %1385 = vmatprep.subr.bf16.mxu0 0
    %1386 = vmatpush1.bf16.xpose.msra.mxu0 0
    %1387 = vmatprep.subr.bf16.mxu0 0
    %1388 = vmatpush1.bf16.xpose.msra.mxu0 0
    %1389 = vmatprep.subr.bf16.mxu0 0
    %1390 = vmatpush1.bf16.xpose.msra.mxu0 0
    %1391 = vmatprep.subr.bf16.mxu0 0
    %1392 = vmatpush1.bf16.xpose.msra.mxu0 0
    %1393 = vmatprep.subr.bf16.mxu0 0
    %1394 = vmatpush1.bf16.xpose.msra.mxu0 0
    %1395 = vmatprep.subr.bf16.mxu0 0
    %1396 = vmatpush1.bf16.xpose.msra.mxu0 0
    %1397 = vmatprep.subr.bf16.mxu0 0
    %1398 = vmatpush1.bf16.xpose.msra.mxu0 0
    %1399 = vmatprep.subr.bf16.mxu0 0
    %1400 = vmatpush1.bf16.xpose.msra.mxu0 0
    %1401 = vmatprep.mubr.bf16.mxu0 %v157
    %1402 = vmatmul.mubr.bf16.gmra.mrb[0].mxu0 %v156
    %v1403 = vpop.f32.mrb[0].mxu0
    %v1404 = vadd.f32 %v1364, %v1403
    %v1405 = vpop.f32.mrb[0].mxu0
    %v1406 = vpop.f32.mrb[0].mxu0
    %v1407 = vpop.f32.mrb[0].mxu0
    %1408 = vdwg.mxu0
    %1409 = vmatprep.subr.bf16.mxu0 %v566
    %1410 = vmatpush1.bf16.xpose.msra.mxu0 %v565
    %1411 = vmatprep.subr.bf16.mxu0 0
    %1412 = vmatpush1.bf16.xpose.msra.mxu0 0
    %1413 = vmatprep.subr.bf16.mxu0 0
    %1414 = vmatpush1.bf16.xpose.msra.mxu0 0
    %1415 = vmatprep.subr.bf16.mxu0 0
    %1416 = vmatpush1.bf16.xpose.msra.mxu0 0
    %1417 = vmatprep.subr.bf16.mxu0 0
    %1418 = vmatpush1.bf16.xpose.msra.mxu0 0
    %1419 = vmatprep.subr.bf16.mxu0 0
    %1420 = vmatpush1.bf16.xpose.msra.mxu0 0
    %1421 = vmatprep.subr.bf16.mxu0 0
    %1422 = vmatpush1.bf16.xpose.msra.mxu0 0
    %1423 = vmatprep.subr.bf16.mxu0 0
    %1424 = vmatpush1.bf16.xpose.msra.mxu0 0
    %1425 = vmatprep.subr.bf16.mxu0 0
    %1426 = vmatpush1.bf16.xpose.msra.mxu0 0
    %1427 = vmatprep.subr.bf16.mxu0 0
    %1428 = vmatpush1.bf16.xpose.msra.mxu0 0
    %1429 = vmatprep.subr.bf16.mxu0 0
    %1430 = vmatpush1.bf16.xpose.msra.mxu0 0
    %1431 = vmatprep.subr.bf16.mxu0 0
    %1432 = vmatpush1.bf16.xpose.msra.mxu0 0
    %1433 = vmatprep.subr.bf16.mxu0 0
    %1434 = vmatpush1.bf16.xpose.msra.mxu0 0
    %1435 = vmatprep.subr.bf16.mxu0 0
    %1436 = vmatpush1.bf16.xpose.msra.mxu0 0
    %1437 = vmatprep.subr.bf16.mxu0 0
    %1438 = vmatpush1.bf16.xpose.msra.mxu0 0
    %1439 = vmatprep.subr.bf16.mxu0 0
    %1440 = vmatpush1.bf16.xpose.msra.mxu0 0
    %1441 = vmatprep.mubr.bf16.mxu0 %v159
    %1442 = vmatmul.mubr.bf16.gmra.mrb[0].mxu0 %v158
    %v1443 = vpop.f32.mrb[0].mxu0
    %v1444 = vadd.f32 %v1404, %v1443
    %v1445 = vpop.f32.mrb[0].mxu0
    %v1446 = vpop.f32.mrb[0].mxu0
    %v1447 = vpop.f32.mrb[0].mxu0
    %1448 = vdwg.mxu0
    %1449 = vmatprep.subr.bf16.mxu0 %v568
    %1450 = vmatpush1.bf16.xpose.msra.mxu0 %v567
    %1451 = vmatprep.subr.bf16.mxu0 0
    %1452 = vmatpush1.bf16.xpose.msra.mxu0 0
    %1453 = vmatprep.subr.bf16.mxu0 0
    %1454 = vmatpush1.bf16.xpose.msra.mxu0 0
    %1455 = vmatprep.subr.bf16.mxu0 0
    %1456 = vmatpush1.bf16.xpose.msra.mxu0 0
    %1457 = vmatprep.subr.bf16.mxu0 0
    %1458 = vmatpush1.bf16.xpose.msra.mxu0 0
    %1459 = vmatprep.subr.bf16.mxu0 0
    %1460 = vmatpush1.bf16.xpose.msra.mxu0 0
    %1461 = vmatprep.subr.bf16.mxu0 0
    %1462 = vmatpush1.bf16.xpose.msra.mxu0 0
    %1463 = vmatprep.subr.bf16.mxu0 0
    %1464 = vmatpush1.bf16.xpose.msra.mxu0 0
    %1465 = vmatprep.subr.bf16.mxu0 0
    %1466 = vmatpush1.bf16.xpose.msra.mxu0 0
    %1467 = vmatprep.subr.bf16.mxu0 0
    %1468 = vmatpush1.bf16.xpose.msra.mxu0 0
    %1469 = vmatprep.subr.bf16.mxu0 0
    %1470 = vmatpush1.bf16.xpose.msra.mxu0 0
    %1471 = vmatprep.subr.bf16.mxu0 0
    %1472 = vmatpush1.bf16.xpose.msra.mxu0 0
    %1473 = vmatprep.subr.bf16.mxu0 0
    %1474 = vmatpush1.bf16.xpose.msra.mxu0 0
    %1475 = vmatprep.subr.bf16.mxu0 0
    %1476 = vmatpush1.bf16.xpose.msra.mxu0 0
    %1477 = vmatprep.subr.bf16.mxu0 0
    %1478 = vmatpush1.bf16.xpose.msra.mxu0 0
    %1479 = vmatprep.subr.bf16.mxu0 0
    %1480 = vmatpush1.bf16.xpose.msra.mxu0 0
    %1481 = vmatprep.mubr.bf16.mxu0 %v161
    %1482 = vmatmul.mubr.bf16.gmra.mrb[0].mxu0 %v160
    %v1483 = vpop.f32.mrb[0].mxu0
    %v1484 = vadd.f32 %v1444, %v1483
    %v1485 = vpop.f32.mrb[0].mxu0
    %v1486 = vpop.f32.mrb[0].mxu0
    %v1487 = vpop.f32.mrb[0].mxu0
    %1488 = vdwg.mxu0
    %1489 = vmatprep.subr.bf16.mxu0 %v570
    %1490 = vmatpush1.bf16.xpose.msra.mxu0 %v569
    %1491 = vmatprep.subr.bf16.mxu0 0
    %1492 = vmatpush1.bf16.xpose.msra.mxu0 0
    %1493 = vmatprep.subr.bf16.mxu0 0
    %1494 = vmatpush1.bf16.xpose.msra.mxu0 0
    %1495 = vmatprep.subr.bf16.mxu0 0
    %1496 = vmatpush1.bf16.xpose.msra.mxu0 0
    %1497 = vmatprep.subr.bf16.mxu0 0
    %1498 = vmatpush1.bf16.xpose.msra.mxu0 0
    %1499 = vmatprep.subr.bf16.mxu0 0
    %1500 = vmatpush1.bf16.xpose.msra.mxu0 0
    %1501 = vmatprep.subr.bf16.mxu0 0
    %1502 = vmatpush1.bf16.xpose.msra.mxu0 0
    %1503 = vmatprep.subr.bf16.mxu0 0
    %1504 = vmatpush1.bf16.xpose.msra.mxu0 0
    %1505 = vmatprep.subr.bf16.mxu0 0
    %1506 = vmatpush1.bf16.xpose.msra.mxu0 0
    %1507 = vmatprep.subr.bf16.mxu0 0
    %1508 = vmatpush1.bf16.xpose.msra.mxu0 0
    %1509 = vmatprep.subr.bf16.mxu0 0
    %1510 = vmatpush1.bf16.xpose.msra.mxu0 0
    %1511 = vmatprep.subr.bf16.mxu0 0
    %1512 = vmatpush1.bf16.xpose.msra.mxu0 0
    %1513 = vmatprep.subr.bf16.mxu0 0
    %1514 = vmatpush1.bf16.xpose.msra.mxu0 0
    %1515 = vmatprep.subr.bf16.mxu0 0
    %1516 = vmatpush1.bf16.xpose.msra.mxu0 0
    %1517 = vmatprep.subr.bf16.mxu0 0
    %1518 = vmatpush1.bf16.xpose.msra.mxu0 0
    %1519 = vmatprep.subr.bf16.mxu0 0
    %1520 = vmatpush1.bf16.xpose.msra.mxu0 0
    %1521 = vmatprep.mubr.bf16.mxu0 %v163
    %1522 = vmatmul.mubr.bf16.gmra.mrb[0].mxu0 %v162
    %v1523 = vpop.f32.mrb[0].mxu0
    %v1524 = vadd.f32 %v1484, %v1523
    %v1525 = vpop.f32.mrb[0].mxu0
    %v1526 = vpop.f32.mrb[0].mxu0
    %v1527 = vpop.f32.mrb[0].mxu0
    %1528 = vdwg.mxu0
    %1529 = vmatprep.subr.bf16.mxu0 %v572
    %1530 = vmatpush1.bf16.xpose.msra.mxu0 %v571
    %1531 = vmatprep.subr.bf16.mxu0 0
    %1532 = vmatpush1.bf16.xpose.msra.mxu0 0
    %1533 = vmatprep.subr.bf16.mxu0 0
    %1534 = vmatpush1.bf16.xpose.msra.mxu0 0
    %1535 = vmatprep.subr.bf16.mxu0 0
    %1536 = vmatpush1.bf16.xpose.msra.mxu0 0
    %1537 = vmatprep.subr.bf16.mxu0 0
    %1538 = vmatpush1.bf16.xpose.msra.mxu0 0
    %1539 = vmatprep.subr.bf16.mxu0 0
    %1540 = vmatpush1.bf16.xpose.msra.mxu0 0
    %1541 = vmatprep.subr.bf16.mxu0 0
    %1542 = vmatpush1.bf16.xpose.msra.mxu0 0
    %1543 = vmatprep.subr.bf16.mxu0 0
    %1544 = vmatpush1.bf16.xpose.msra.mxu0 0
    %1545 = vmatprep.subr.bf16.mxu0 0
    %1546 = vmatpush1.bf16.xpose.msra.mxu0 0
    %1547 = vmatprep.subr.bf16.mxu0 0
    %1548 = vmatpush1.bf16.xpose.msra.mxu0 0
    %1549 = vmatprep.subr.bf16.mxu0 0
    %1550 = vmatpush1.bf16.xpose.msra.mxu0 0
    %1551 = vmatprep.subr.bf16.mxu0 0
    %1552 = vmatpush1.bf16.xpose.msra.mxu0 0
    %1553 = vmatprep.subr.bf16.mxu0 0
    %1554 = vmatpush1.bf16.xpose.msra.mxu0 0
    %1555 = vmatprep.subr.bf16.mxu0 0
    %1556 = vmatpush1.bf16.xpose.msra.mxu0 0
    %1557 = vmatprep.subr.bf16.mxu0 0
    %1558 = vmatpush1.bf16.xpose.msra.mxu0 0
    %1559 = vmatprep.subr.bf16.mxu0 0
    %1560 = vmatpush1.bf16.xpose.msra.mxu0 0
    %1561 = vmatprep.mubr.bf16.mxu0 %v165
    %1562 = vmatmul.mubr.bf16.gmra.mrb[0].mxu0 %v164
    %v1563 = vpop.f32.mrb[0].mxu0
    %v1564 = vadd.f32 %v1524, %v1563
    %v1565 = vpop.f32.mrb[0].mxu0
    %v1566 = vpop.f32.mrb[0].mxu0
    %v1567 = vpop.f32.mrb[0].mxu0
    %1568 = vdwg.mxu0
    %1569 = vmatprep.subr.bf16.mxu0 %v574
    %1570 = vmatpush1.bf16.xpose.msra.mxu0 %v573
    %1571 = vmatprep.subr.bf16.mxu0 0
    %1572 = vmatpush1.bf16.xpose.msra.mxu0 0
    %1573 = vmatprep.subr.bf16.mxu0 0
    %1574 = vmatpush1.bf16.xpose.msra.mxu0 0
    %1575 = vmatprep.subr.bf16.mxu0 0
    %1576 = vmatpush1.bf16.xpose.msra.mxu0 0
    %1577 = vmatprep.subr.bf16.mxu0 0
    %1578 = vmatpush1.bf16.xpose.msra.mxu0 0
    %1579 = vmatprep.subr.bf16.mxu0 0
    %1580 = vmatpush1.bf16.xpose.msra.mxu0 0
    %1581 = vmatprep.subr.bf16.mxu0 0
    %1582 = vmatpush1.bf16.xpose.msra.mxu0 0
    %1583 = vmatprep.subr.bf16.mxu0 0
    %1584 = vmatpush1.bf16.xpose.msra.mxu0 0
    %1585 = vmatprep.subr.bf16.mxu0 0
    %1586 = vmatpush1.bf16.xpose.msra.mxu0 0
    %1587 = vmatprep.subr.bf16.mxu0 0
    %1588 = vmatpush1.bf16.xpose.msra.mxu0 0
    %1589 = vmatprep.subr.bf16.mxu0 0
    %1590 = vmatpush1.bf16.xpose.msra.mxu0 0
    %1591 = vmatprep.subr.bf16.mxu0 0
    %1592 = vmatpush1.bf16.xpose.msra.mxu0 0
    %1593 = vmatprep.subr.bf16.mxu0 0
    %1594 = vmatpush1.bf16.xpose.msra.mxu0 0
    %1595 = vmatprep.subr.bf16.mxu0 0
    %1596 = vmatpush1.bf16.xpose.msra.mxu0 0
    %1597 = vmatprep.subr.bf16.mxu0 0
    %1598 = vmatpush1.bf16.xpose.msra.mxu0 0
    %1599 = vmatprep.subr.bf16.mxu0 0
    %1600 = vmatpush1.bf16.xpose.msra.mxu0 0
    %1601 = vmatprep.mubr.bf16.mxu0 %v167
    %1602 = vmatmul.mubr.bf16.gmra.mrb[0].mxu0 %v166
    %v1603 = vpop.f32.mrb[0].mxu0
    %v1604 = vadd.f32 %v1564, %v1603
    %v1605 = vpop.f32.mrb[0].mxu0
    %v1606 = vpop.f32.mrb[0].mxu0
    %v1607 = vpop.f32.mrb[0].mxu0
    %1608 = vdwg.mxu0
    %1609 = vmatprep.subr.bf16.mxu0 %v576
    %1610 = vmatpush1.bf16.xpose.msra.mxu0 %v575
    %1611 = vmatprep.subr.bf16.mxu0 0
    %1612 = vmatpush1.bf16.xpose.msra.mxu0 0
    %1613 = vmatprep.subr.bf16.mxu0 0
    %1614 = vmatpush1.bf16.xpose.msra.mxu0 0
    %1615 = vmatprep.subr.bf16.mxu0 0
    %1616 = vmatpush1.bf16.xpose.msra.mxu0 0
    %1617 = vmatprep.subr.bf16.mxu0 0
    %1618 = vmatpush1.bf16.xpose.msra.mxu0 0
    %1619 = vmatprep.subr.bf16.mxu0 0
    %1620 = vmatpush1.bf16.xpose.msra.mxu0 0
    %1621 = vmatprep.subr.bf16.mxu0 0
    %1622 = vmatpush1.bf16.xpose.msra.mxu0 0
    %1623 = vmatprep.subr.bf16.mxu0 0
    %1624 = vmatpush1.bf16.xpose.msra.mxu0 0
    %1625 = vmatprep.subr.bf16.mxu0 0
    %1626 = vmatpush1.bf16.xpose.msra.mxu0 0
    %1627 = vmatprep.subr.bf16.mxu0 0
    %1628 = vmatpush1.bf16.xpose.msra.mxu0 0
    %1629 = vmatprep.subr.bf16.mxu0 0
    %1630 = vmatpush1.bf16.xpose.msra.mxu0 0
    %1631 = vmatprep.subr.bf16.mxu0 0
    %1632 = vmatpush1.bf16.xpose.msra.mxu0 0
    %1633 = vmatprep.subr.bf16.mxu0 0
    %1634 = vmatpush1.bf16.xpose.msra.mxu0 0
    %1635 = vmatprep.subr.bf16.mxu0 0
    %1636 = vmatpush1.bf16.xpose.msra.mxu0 0
    %1637 = vmatprep.subr.bf16.mxu0 0
    %1638 = vmatpush1.bf16.xpose.msra.mxu0 0
    %1639 = vmatprep.subr.bf16.mxu0 0
    %1640 = vmatpush1.bf16.xpose.msra.mxu0 0
    %1641 = vmatprep.mubr.bf16.mxu0 %v169
    %1642 = vmatmul.mubr.bf16.gmra.mrb[0].mxu0 %v168
    %v1643 = vpop.f32.mrb[0].mxu0
    %v1644 = vadd.f32 %v1604, %v1643
    %v1645 = vpop.f32.mrb[0].mxu0
    %v1646 = vpop.f32.mrb[0].mxu0
    %v1647 = vpop.f32.mrb[0].mxu0
    %1648 = vdwg.mxu0
    %1649 = vmatprep.subr.bf16.mxu0 %v578
    %1650 = vmatpush1.bf16.xpose.msra.mxu0 %v577
    %1651 = vmatprep.subr.bf16.mxu0 0
    %1652 = vmatpush1.bf16.xpose.msra.mxu0 0
    %1653 = vmatprep.subr.bf16.mxu0 0
    %1654 = vmatpush1.bf16.xpose.msra.mxu0 0
    %1655 = vmatprep.subr.bf16.mxu0 0
    %1656 = vmatpush1.bf16.xpose.msra.mxu0 0
    %1657 = vmatprep.subr.bf16.mxu0 0
    %1658 = vmatpush1.bf16.xpose.msra.mxu0 0
    %1659 = vmatprep.subr.bf16.mxu0 0
    %1660 = vmatpush1.bf16.xpose.msra.mxu0 0
    %1661 = vmatprep.subr.bf16.mxu0 0
    %1662 = vmatpush1.bf16.xpose.msra.mxu0 0
    %1663 = vmatprep.subr.bf16.mxu0 0
    %1664 = vmatpush1.bf16.xpose.msra.mxu0 0
    %1665 = vmatprep.subr.bf16.mxu0 0
    %1666 = vmatpush1.bf16.xpose.msra.mxu0 0
    %1667 = vmatprep.subr.bf16.mxu0 0
    %1668 = vmatpush1.bf16.xpose.msra.mxu0 0
    %1669 = vmatprep.subr.bf16.mxu0 0
    %1670 = vmatpush1.bf16.xpose.msra.mxu0 0
    %1671 = vmatprep.subr.bf16.mxu0 0
    %1672 = vmatpush1.bf16.xpose.msra.mxu0 0
    %1673 = vmatprep.subr.bf16.mxu0 0
    %1674 = vmatpush1.bf16.xpose.msra.mxu0 0
    %1675 = vmatprep.subr.bf16.mxu0 0
    %1676 = vmatpush1.bf16.xpose.msra.mxu0 0
    %1677 = vmatprep.subr.bf16.mxu0 0
    %1678 = vmatpush1.bf16.xpose.msra.mxu0 0
    %1679 = vmatprep.subr.bf16.mxu0 0
    %1680 = vmatpush1.bf16.xpose.msra.mxu0 0
    %1681 = vmatprep.mubr.bf16.mxu0 %v171
    %1682 = vmatmul.mubr.bf16.gmra.mrb[0].mxu0 %v170
    %v1683 = vpop.f32.mrb[0].mxu0
    %v1684 = vadd.f32 %v1644, %v1683
    %v1685 = vpop.f32.mrb[0].mxu0
    %v1686 = vpop.f32.mrb[0].mxu0
    %v1687 = vpop.f32.mrb[0].mxu0
    %1688 = vdwg.mxu0
    %1689 = vmatprep.subr.bf16.mxu0 %v580
    %1690 = vmatpush1.bf16.xpose.msra.mxu0 %v579
    %1691 = vmatprep.subr.bf16.mxu0 0
    %1692 = vmatpush1.bf16.xpose.msra.mxu0 0
    %1693 = vmatprep.subr.bf16.mxu0 0
    %1694 = vmatpush1.bf16.xpose.msra.mxu0 0
    %1695 = vmatprep.subr.bf16.mxu0 0
    %1696 = vmatpush1.bf16.xpose.msra.mxu0 0
    %1697 = vmatprep.subr.bf16.mxu0 0
    %1698 = vmatpush1.bf16.xpose.msra.mxu0 0
    %1699 = vmatprep.subr.bf16.mxu0 0
    %1700 = vmatpush1.bf16.xpose.msra.mxu0 0
    %1701 = vmatprep.subr.bf16.mxu0 0
    %1702 = vmatpush1.bf16.xpose.msra.mxu0 0
    %1703 = vmatprep.subr.bf16.mxu0 0
    %1704 = vmatpush1.bf16.xpose.msra.mxu0 0
    %1705 = vmatprep.subr.bf16.mxu0 0
    %1706 = vmatpush1.bf16.xpose.msra.mxu0 0
    %1707 = vmatprep.subr.bf16.mxu0 0
    %1708 = vmatpush1.bf16.xpose.msra.mxu0 0
    %1709 = vmatprep.subr.bf16.mxu0 0
    %1710 = vmatpush1.bf16.xpose.msra.mxu0 0
    %1711 = vmatprep.subr.bf16.mxu0 0
    %1712 = vmatpush1.bf16.xpose.msra.mxu0 0
    %1713 = vmatprep.subr.bf16.mxu0 0
    %1714 = vmatpush1.bf16.xpose.msra.mxu0 0
    %1715 = vmatprep.subr.bf16.mxu0 0
    %1716 = vmatpush1.bf16.xpose.msra.mxu0 0
    %1717 = vmatprep.subr.bf16.mxu0 0
    %1718 = vmatpush1.bf16.xpose.msra.mxu0 0
    %1719 = vmatprep.subr.bf16.mxu0 0
    %1720 = vmatpush1.bf16.xpose.msra.mxu0 0
    %1721 = vmatprep.mubr.bf16.mxu0 %v173
    %1722 = vmatmul.mubr.bf16.gmra.mrb[0].mxu0 %v172
    %v1723 = vpop.f32.mrb[0].mxu0
    %v1724 = vadd.f32 %v1684, %v1723
    %v1725 = vpop.f32.mrb[0].mxu0
    %v1726 = vpop.f32.mrb[0].mxu0
    %v1727 = vpop.f32.mrb[0].mxu0
    %1728 = vdwg.mxu0
    %1729 = vmatprep.subr.bf16.mxu0 %v582
    %1730 = vmatpush1.bf16.xpose.msra.mxu0 %v581
    %1731 = vmatprep.subr.bf16.mxu0 0
    %1732 = vmatpush1.bf16.xpose.msra.mxu0 0
    %1733 = vmatprep.subr.bf16.mxu0 0
    %1734 = vmatpush1.bf16.xpose.msra.mxu0 0
    %1735 = vmatprep.subr.bf16.mxu0 0
    %1736 = vmatpush1.bf16.xpose.msra.mxu0 0
    %1737 = vmatprep.subr.bf16.mxu0 0
    %1738 = vmatpush1.bf16.xpose.msra.mxu0 0
    %1739 = vmatprep.subr.bf16.mxu0 0
    %1740 = vmatpush1.bf16.xpose.msra.mxu0 0
    %1741 = vmatprep.subr.bf16.mxu0 0
    %1742 = vmatpush1.bf16.xpose.msra.mxu0 0
    %1743 = vmatprep.subr.bf16.mxu0 0
    %1744 = vmatpush1.bf16.xpose.msra.mxu0 0
    %1745 = vmatprep.subr.bf16.mxu0 0
    %1746 = vmatpush1.bf16.xpose.msra.mxu0 0
    %1747 = vmatprep.subr.bf16.mxu0 0
    %1748 = vmatpush1.bf16.xpose.msra.mxu0 0
    %1749 = vmatprep.subr.bf16.mxu0 0
    %1750 = vmatpush1.bf16.xpose.msra.mxu0 0
    %1751 = vmatprep.subr.bf16.mxu0 0
    %1752 = vmatpush1.bf16.xpose.msra.mxu0 0
    %1753 = vmatprep.subr.bf16.mxu0 0
    %1754 = vmatpush1.bf16.xpose.msra.mxu0 0
    %1755 = vmatprep.subr.bf16.mxu0 0
    %1756 = vmatpush1.bf16.xpose.msra.mxu0 0
    %1757 = vmatprep.subr.bf16.mxu0 0
    %1758 = vmatpush1.bf16.xpose.msra.mxu0 0
    %1759 = vmatprep.subr.bf16.mxu0 0
    %1760 = vmatpush1.bf16.xpose.msra.mxu0 0
    %1761 = vmatprep.mubr.bf16.mxu0 %v175
    %1762 = vmatmul.mubr.bf16.gmra.mrb[0].mxu0 %v174
    %v1763 = vpop.f32.mrb[0].mxu0
    %v1764 = vadd.f32 %v1724, %v1763
    %v1765 = vpop.f32.mrb[0].mxu0
    %v1766 = vpop.f32.mrb[0].mxu0
    %v1767 = vpop.f32.mrb[0].mxu0
    %1768 = vdwg.mxu0
    %1769 = vmatprep.subr.bf16.mxu0 %v584
    %1770 = vmatpush1.bf16.xpose.msra.mxu0 %v583
    %1771 = vmatprep.subr.bf16.mxu0 0
    %1772 = vmatpush1.bf16.xpose.msra.mxu0 0
    %1773 = vmatprep.subr.bf16.mxu0 0
    %1774 = vmatpush1.bf16.xpose.msra.mxu0 0
    %1775 = vmatprep.subr.bf16.mxu0 0
    %1776 = vmatpush1.bf16.xpose.msra.mxu0 0
    %1777 = vmatprep.subr.bf16.mxu0 0
    %1778 = vmatpush1.bf16.xpose.msra.mxu0 0
    %1779 = vmatprep.subr.bf16.mxu0 0
    %1780 = vmatpush1.bf16.xpose.msra.mxu0 0
    %1781 = vmatprep.subr.bf16.mxu0 0
    %1782 = vmatpush1.bf16.xpose.msra.mxu0 0
    %1783 = vmatprep.subr.bf16.mxu0 0
    %1784 = vmatpush1.bf16.xpose.msra.mxu0 0
    %1785 = vmatprep.subr.bf16.mxu0 0
    %1786 = vmatpush1.bf16.xpose.msra.mxu0 0
    %1787 = vmatprep.subr.bf16.mxu0 0
    %1788 = vmatpush1.bf16.xpose.msra.mxu0 0
    %1789 = vmatprep.subr.bf16.mxu0 0
    %1790 = vmatpush1.bf16.xpose.msra.mxu0 0
    %1791 = vmatprep.subr.bf16.mxu0 0
    %1792 = vmatpush1.bf16.xpose.msra.mxu0 0
    %1793 = vmatprep.subr.bf16.mxu0 0
    %1794 = vmatpush1.bf16.xpose.msra.mxu0 0
    %1795 = vmatprep.subr.bf16.mxu0 0
    %1796 = vmatpush1.bf16.xpose.msra.mxu0 0
    %1797 = vmatprep.subr.bf16.mxu0 0
    %1798 = vmatpush1.bf16.xpose.msra.mxu0 0
    %1799 = vmatprep.subr.bf16.mxu0 0
    %1800 = vmatpush1.bf16.xpose.msra.mxu0 0
    %1801 = vmatprep.mubr.bf16.mxu0 %v177
    %1802 = vmatmul.mubr.bf16.gmra.mrb[0].mxu0 %v176
    %v1803 = vpop.f32.mrb[0].mxu0
    %v1804 = vadd.f32 %v1764, %v1803
    %v1805 = vpop.f32.mrb[0].mxu0
    %v1806 = vpop.f32.mrb[0].mxu0
    %v1807 = vpop.f32.mrb[0].mxu0
    %1808 = vdwg.mxu0
    %1809 = vmatprep.subr.bf16.mxu0 %v586
    %1810 = vmatpush1.bf16.xpose.msra.mxu0 %v585
    %1811 = vmatprep.subr.bf16.mxu0 0
    %1812 = vmatpush1.bf16.xpose.msra.mxu0 0
    %1813 = vmatprep.subr.bf16.mxu0 0
    %1814 = vmatpush1.bf16.xpose.msra.mxu0 0
    %1815 = vmatprep.subr.bf16.mxu0 0
    %1816 = vmatpush1.bf16.xpose.msra.mxu0 0
    %1817 = vmatprep.subr.bf16.mxu0 0
    %1818 = vmatpush1.bf16.xpose.msra.mxu0 0
    %1819 = vmatprep.subr.bf16.mxu0 0
    %1820 = vmatpush1.bf16.xpose.msra.mxu0 0
    %1821 = vmatprep.subr.bf16.mxu0 0
    %1822 = vmatpush1.bf16.xpose.msra.mxu0 0
    %1823 = vmatprep.subr.bf16.mxu0 0
    %1824 = vmatpush1.bf16.xpose.msra.mxu0 0
    %1825 = vmatprep.subr.bf16.mxu0 0
    %1826 = vmatpush1.bf16.xpose.msra.mxu0 0
    %1827 = vmatprep.subr.bf16.mxu0 0
    %1828 = vmatpush1.bf16.xpose.msra.mxu0 0
    %1829 = vmatprep.subr.bf16.mxu0 0
    %1830 = vmatpush1.bf16.xpose.msra.mxu0 0
    %1831 = vmatprep.subr.bf16.mxu0 0
    %1832 = vmatpush1.bf16.xpose.msra.mxu0 0
    %1833 = vmatprep.subr.bf16.mxu0 0
    %1834 = vmatpush1.bf16.xpose.msra.mxu0 0
    %1835 = vmatprep.subr.bf16.mxu0 0
    %1836 = vmatpush1.bf16.xpose.msra.mxu0 0
    %1837 = vmatprep.subr.bf16.mxu0 0
    %1838 = vmatpush1.bf16.xpose.msra.mxu0 0
    %1839 = vmatprep.subr.bf16.mxu0 0
    %1840 = vmatpush1.bf16.xpose.msra.mxu0 0
    %1841 = vmatprep.mubr.bf16.mxu0 %v179
    %1842 = vmatmul.mubr.bf16.gmra.mrb[0].mxu0 %v178
    %v1843 = vpop.f32.mrb[0].mxu0
    %v1844 = vadd.f32 %v1804, %v1843
    %v1845 = vpop.f32.mrb[0].mxu0
    %v1846 = vpop.f32.mrb[0].mxu0
    %v1847 = vpop.f32.mrb[0].mxu0
    %1848 = vdwg.mxu0
    %1849 = vmatprep.subr.bf16.mxu0 %v588
    %1850 = vmatpush1.bf16.xpose.msra.mxu0 %v587
    %1851 = vmatprep.subr.bf16.mxu0 0
    %1852 = vmatpush1.bf16.xpose.msra.mxu0 0
    %1853 = vmatprep.subr.bf16.mxu0 0
    %1854 = vmatpush1.bf16.xpose.msra.mxu0 0
    %1855 = vmatprep.subr.bf16.mxu0 0
    %1856 = vmatpush1.bf16.xpose.msra.mxu0 0
    %1857 = vmatprep.subr.bf16.mxu0 0
    %1858 = vmatpush1.bf16.xpose.msra.mxu0 0
    %1859 = vmatprep.subr.bf16.mxu0 0
    %1860 = vmatpush1.bf16.xpose.msra.mxu0 0
    %1861 = vmatprep.subr.bf16.mxu0 0
    %1862 = vmatpush1.bf16.xpose.msra.mxu0 0
    %1863 = vmatprep.subr.bf16.mxu0 0
    %1864 = vmatpush1.bf16.xpose.msra.mxu0 0
    %1865 = vmatprep.subr.bf16.mxu0 0
    %1866 = vmatpush1.bf16.xpose.msra.mxu0 0
    %1867 = vmatprep.subr.bf16.mxu0 0
    %1868 = vmatpush1.bf16.xpose.msra.mxu0 0
    %1869 = vmatprep.subr.bf16.mxu0 0
    %1870 = vmatpush1.bf16.xpose.msra.mxu0 0
    %1871 = vmatprep.subr.bf16.mxu0 0
    %1872 = vmatpush1.bf16.xpose.msra.mxu0 0
    %1873 = vmatprep.subr.bf16.mxu0 0
    %1874 = vmatpush1.bf16.xpose.msra.mxu0 0
    %1875 = vmatprep.subr.bf16.mxu0 0
    %1876 = vmatpush1.bf16.xpose.msra.mxu0 0
    %1877 = vmatprep.subr.bf16.mxu0 0
    %1878 = vmatpush1.bf16.xpose.msra.mxu0 0
    %1879 = vmatprep.subr.bf16.mxu0 0
    %1880 = vmatpush1.bf16.xpose.msra.mxu0 0
    %1881 = vmatprep.mubr.bf16.mxu0 %v181
    %1882 = vmatmul.mubr.bf16.gmra.mrb[0].mxu0 %v180
    %v1883 = vpop.f32.mrb[0].mxu0
    %v1884 = vadd.f32 %v1844, %v1883
    %v1885 = vpop.f32.mrb[0].mxu0
    %v1886 = vpop.f32.mrb[0].mxu0
    %v1887 = vpop.f32.mrb[0].mxu0
    %1888 = vdwg.mxu0
    %1889 = vmatprep.subr.bf16.mxu0 %v590
    %1890 = vmatpush1.bf16.xpose.msra.mxu0 %v589
    %1891 = vmatprep.subr.bf16.mxu0 0
    %1892 = vmatpush1.bf16.xpose.msra.mxu0 0
    %1893 = vmatprep.subr.bf16.mxu0 0
    %1894 = vmatpush1.bf16.xpose.msra.mxu0 0
    %1895 = vmatprep.subr.bf16.mxu0 0
    %1896 = vmatpush1.bf16.xpose.msra.mxu0 0
    %1897 = vmatprep.subr.bf16.mxu0 0
    %1898 = vmatpush1.bf16.xpose.msra.mxu0 0
    %1899 = vmatprep.subr.bf16.mxu0 0
    %1900 = vmatpush1.bf16.xpose.msra.mxu0 0
    %1901 = vmatprep.subr.bf16.mxu0 0
    %1902 = vmatpush1.bf16.xpose.msra.mxu0 0
    %1903 = vmatprep.subr.bf16.mxu0 0
    %1904 = vmatpush1.bf16.xpose.msra.mxu0 0
    %1905 = vmatprep.subr.bf16.mxu0 0
    %1906 = vmatpush1.bf16.xpose.msra.mxu0 0
    %1907 = vmatprep.subr.bf16.mxu0 0
    %1908 = vmatpush1.bf16.xpose.msra.mxu0 0
    %1909 = vmatprep.subr.bf16.mxu0 0
    %1910 = vmatpush1.bf16.xpose.msra.mxu0 0
    %1911 = vmatprep.subr.bf16.mxu0 0
    %1912 = vmatpush1.bf16.xpose.msra.mxu0 0
    %1913 = vmatprep.subr.bf16.mxu0 0
    %1914 = vmatpush1.bf16.xpose.msra.mxu0 0
    %1915 = vmatprep.subr.bf16.mxu0 0
    %1916 = vmatpush1.bf16.xpose.msra.mxu0 0
    %1917 = vmatprep.subr.bf16.mxu0 0
    %1918 = vmatpush1.bf16.xpose.msra.mxu0 0
    %1919 = vmatprep.subr.bf16.mxu0 0
    %1920 = vmatpush1.bf16.xpose.msra.mxu0 0
    %1921 = vmatprep.mubr.bf16.mxu0 %v183
    %1922 = vmatmul.mubr.bf16.gmra.mrb[0].mxu0 %v182
    %v1923 = vpop.f32.mrb[0].mxu0
    %v1924 = vadd.f32 %v1884, %v1923
    %v1925 = vpop.f32.mrb[0].mxu0
    %v1926 = vpop.f32.mrb[0].mxu0
    %v1927 = vpop.f32.mrb[0].mxu0
    %1928 = vdwg.mxu0
    %1929 = vmatprep.subr.bf16.mxu0 %v592
    %1930 = vmatpush1.bf16.xpose.msra.mxu0 %v591
    %1931 = vmatprep.subr.bf16.mxu0 0
    %1932 = vmatpush1.bf16.xpose.msra.mxu0 0
    %1933 = vmatprep.subr.bf16.mxu0 0
    %1934 = vmatpush1.bf16.xpose.msra.mxu0 0
    %1935 = vmatprep.subr.bf16.mxu0 0
    %1936 = vmatpush1.bf16.xpose.msra.mxu0 0
    %1937 = vmatprep.subr.bf16.mxu0 0
    %1938 = vmatpush1.bf16.xpose.msra.mxu0 0
    %1939 = vmatprep.subr.bf16.mxu0 0
    %1940 = vmatpush1.bf16.xpose.msra.mxu0 0
    %1941 = vmatprep.subr.bf16.mxu0 0
    %1942 = vmatpush1.bf16.xpose.msra.mxu0 0
    %1943 = vmatprep.subr.bf16.mxu0 0
    %1944 = vmatpush1.bf16.xpose.msra.mxu0 0
    %1945 = vmatprep.subr.bf16.mxu0 0
    %1946 = vmatpush1.bf16.xpose.msra.mxu0 0
    %1947 = vmatprep.subr.bf16.mxu0 0
    %1948 = vmatpush1.bf16.xpose.msra.mxu0 0
    %1949 = vmatprep.subr.bf16.mxu0 0
    %1950 = vmatpush1.bf16.xpose.msra.mxu0 0
    %1951 = vmatprep.subr.bf16.mxu0 0
    %1952 = vmatpush1.bf16.xpose.msra.mxu0 0
    %1953 = vmatprep.subr.bf16.mxu0 0
    %1954 = vmatpush1.bf16.xpose.msra.mxu0 0
    %1955 = vmatprep.subr.bf16.mxu0 0
    %1956 = vmatpush1.bf16.xpose.msra.mxu0 0
    %1957 = vmatprep.subr.bf16.mxu0 0
    %1958 = vmatpush1.bf16.xpose.msra.mxu0 0
    %1959 = vmatprep.subr.bf16.mxu0 0
    %1960 = vmatpush1.bf16.xpose.msra.mxu0 0
    %1961 = vmatprep.mubr.bf16.mxu0 %v185
    %1962 = vmatmul.mubr.bf16.gmra.mrb[0].mxu0 %v184
    %v1963 = vpop.f32.mrb[0].mxu0
    %v1964 = vadd.f32 %v1924, %v1963
    %v1965 = vpop.f32.mrb[0].mxu0
    %v1966 = vpop.f32.mrb[0].mxu0
    %v1967 = vpop.f32.mrb[0].mxu0
    %1968 = vdwg.mxu0
    %1969 = vmatprep.subr.bf16.mxu0 %v594
    %1970 = vmatpush1.bf16.xpose.msra.mxu0 %v593
    %1971 = vmatprep.subr.bf16.mxu0 0
    %1972 = vmatpush1.bf16.xpose.msra.mxu0 0
    %1973 = vmatprep.subr.bf16.mxu0 0
    %1974 = vmatpush1.bf16.xpose.msra.mxu0 0
    %1975 = vmatprep.subr.bf16.mxu0 0
    %1976 = vmatpush1.bf16.xpose.msra.mxu0 0
    %1977 = vmatprep.subr.bf16.mxu0 0
    %1978 = vmatpush1.bf16.xpose.msra.mxu0 0
    %1979 = vmatprep.subr.bf16.mxu0 0
    %1980 = vmatpush1.bf16.xpose.msra.mxu0 0
    %1981 = vmatprep.subr.bf16.mxu0 0
    %1982 = vmatpush1.bf16.xpose.msra.mxu0 0
    %1983 = vmatprep.subr.bf16.mxu0 0
    %1984 = vmatpush1.bf16.xpose.msra.mxu0 0
    %1985 = vmatprep.subr.bf16.mxu0 0
    %1986 = vmatpush1.bf16.xpose.msra.mxu0 0
    %1987 = vmatprep.subr.bf16.mxu0 0
    %1988 = vmatpush1.bf16.xpose.msra.mxu0 0
    %1989 = vmatprep.subr.bf16.mxu0 0
    %1990 = vmatpush1.bf16.xpose.msra.mxu0 0
    %1991 = vmatprep.subr.bf16.mxu0 0
    %1992 = vmatpush1.bf16.xpose.msra.mxu0 0
    %1993 = vmatprep.subr.bf16.mxu0 0
    %1994 = vmatpush1.bf16.xpose.msra.mxu0 0
    %1995 = vmatprep.subr.bf16.mxu0 0
    %1996 = vmatpush1.bf16.xpose.msra.mxu0 0
    %1997 = vmatprep.subr.bf16.mxu0 0
    %1998 = vmatpush1.bf16.xpose.msra.mxu0 0
    %1999 = vmatprep.subr.bf16.mxu0 0
    %2000 = vmatpush1.bf16.xpose.msra.mxu0 0
    %2001 = vmatprep.mubr.bf16.mxu0 %v187
    %2002 = vmatmul.mubr.bf16.gmra.mrb[0].mxu0 %v186
    %v2003 = vpop.f32.mrb[0].mxu0
    %v2004 = vadd.f32 %v1964, %v2003
    %v2005 = vpop.f32.mrb[0].mxu0
    %v2006 = vpop.f32.mrb[0].mxu0
    %v2007 = vpop.f32.mrb[0].mxu0
    %2008 = vdwg.mxu0
    %2009 = vmatprep.subr.bf16.mxu0 %v596
    %2010 = vmatpush1.bf16.xpose.msra.mxu0 %v595
    %2011 = vmatprep.subr.bf16.mxu0 0
    %2012 = vmatpush1.bf16.xpose.msra.mxu0 0
    %2013 = vmatprep.subr.bf16.mxu0 0
    %2014 = vmatpush1.bf16.xpose.msra.mxu0 0
    %2015 = vmatprep.subr.bf16.mxu0 0
    %2016 = vmatpush1.bf16.xpose.msra.mxu0 0
    %2017 = vmatprep.subr.bf16.mxu0 0
    %2018 = vmatpush1.bf16.xpose.msra.mxu0 0
    %2019 = vmatprep.subr.bf16.mxu0 0
    %2020 = vmatpush1.bf16.xpose.msra.mxu0 0
    %2021 = vmatprep.subr.bf16.mxu0 0
    %2022 = vmatpush1.bf16.xpose.msra.mxu0 0
    %2023 = vmatprep.subr.bf16.mxu0 0
    %2024 = vmatpush1.bf16.xpose.msra.mxu0 0
    %2025 = vmatprep.subr.bf16.mxu0 0
    %2026 = vmatpush1.bf16.xpose.msra.mxu0 0
    %2027 = vmatprep.subr.bf16.mxu0 0
    %2028 = vmatpush1.bf16.xpose.msra.mxu0 0
    %2029 = vmatprep.subr.bf16.mxu0 0
    %2030 = vmatpush1.bf16.xpose.msra.mxu0 0
    %2031 = vmatprep.subr.bf16.mxu0 0
    %2032 = vmatpush1.bf16.xpose.msra.mxu0 0
    %2033 = vmatprep.subr.bf16.mxu0 0
    %2034 = vmatpush1.bf16.xpose.msra.mxu0 0
    %2035 = vmatprep.subr.bf16.mxu0 0
    %2036 = vmatpush1.bf16.xpose.msra.mxu0 0
    %2037 = vmatprep.subr.bf16.mxu0 0
    %2038 = vmatpush1.bf16.xpose.msra.mxu0 0
    %2039 = vmatprep.subr.bf16.mxu0 0
    %2040 = vmatpush1.bf16.xpose.msra.mxu0 0
    %2041 = vmatprep.mubr.bf16.mxu0 %v189
    %2042 = vmatmul.mubr.bf16.gmra.mrb[0].mxu0 %v188
    %v2043 = vpop.f32.mrb[0].mxu0
    %v2044 = vadd.f32 %v2004, %v2043
    %v2045 = vpop.f32.mrb[0].mxu0
    %v2046 = vpop.f32.mrb[0].mxu0
    %v2047 = vpop.f32.mrb[0].mxu0
    %2048 = vdwg.mxu0
    %2049 = vmatprep.subr.bf16.mxu0 %v598
    %2050 = vmatpush1.bf16.xpose.msra.mxu0 %v597
    %2051 = vmatprep.subr.bf16.mxu0 0
    %2052 = vmatpush1.bf16.xpose.msra.mxu0 0
    %2053 = vmatprep.subr.bf16.mxu0 0
    %2054 = vmatpush1.bf16.xpose.msra.mxu0 0
    %2055 = vmatprep.subr.bf16.mxu0 0
    %2056 = vmatpush1.bf16.xpose.msra.mxu0 0
    %2057 = vmatprep.subr.bf16.mxu0 0
    %2058 = vmatpush1.bf16.xpose.msra.mxu0 0
    %2059 = vmatprep.subr.bf16.mxu0 0
    %2060 = vmatpush1.bf16.xpose.msra.mxu0 0
    %2061 = vmatprep.subr.bf16.mxu0 0
    %2062 = vmatpush1.bf16.xpose.msra.mxu0 0
    %2063 = vmatprep.subr.bf16.mxu0 0
    %2064 = vmatpush1.bf16.xpose.msra.mxu0 0
    %2065 = vmatprep.subr.bf16.mxu0 0
    %2066 = vmatpush1.bf16.xpose.msra.mxu0 0
    %2067 = vmatprep.subr.bf16.mxu0 0
    %2068 = vmatpush1.bf16.xpose.msra.mxu0 0
    %2069 = vmatprep.subr.bf16.mxu0 0
    %2070 = vmatpush1.bf16.xpose.msra.mxu0 0
    %2071 = vmatprep.subr.bf16.mxu0 0
    %2072 = vmatpush1.bf16.xpose.msra.mxu0 0
    %2073 = vmatprep.subr.bf16.mxu0 0
    %2074 = vmatpush1.bf16.xpose.msra.mxu0 0
    %2075 = vmatprep.subr.bf16.mxu0 0
    %2076 = vmatpush1.bf16.xpose.msra.mxu0 0
    %2077 = vmatprep.subr.bf16.mxu0 0
    %2078 = vmatpush1.bf16.xpose.msra.mxu0 0
    %2079 = vmatprep.subr.bf16.mxu0 0
    %2080 = vmatpush1.bf16.xpose.msra.mxu0 0
    %2081 = vmatprep.mubr.bf16.mxu0 %v191
    %2082 = vmatmul.mubr.bf16.gmra.mrb[0].mxu0 %v190
    %v2083 = vpop.f32.mrb[0].mxu0
    %v2084 = vadd.f32 %v2044, %v2083
    %v2085 = vpop.f32.mrb[0].mxu0
    %v2086 = vpop.f32.mrb[0].mxu0
    %v2087 = vpop.f32.mrb[0].mxu0
    %2088 = vdwg.mxu0
    %2089 = vmatprep.subr.bf16.mxu0 %v600
    %2090 = vmatpush1.bf16.xpose.msra.mxu0 %v599
    %2091 = vmatprep.subr.bf16.mxu0 0
    %2092 = vmatpush1.bf16.xpose.msra.mxu0 0
    %2093 = vmatprep.subr.bf16.mxu0 0
    %2094 = vmatpush1.bf16.xpose.msra.mxu0 0
    %2095 = vmatprep.subr.bf16.mxu0 0
    %2096 = vmatpush1.bf16.xpose.msra.mxu0 0
    %2097 = vmatprep.subr.bf16.mxu0 0
    %2098 = vmatpush1.bf16.xpose.msra.mxu0 0
    %2099 = vmatprep.subr.bf16.mxu0 0
    %2100 = vmatpush1.bf16.xpose.msra.mxu0 0
    %2101 = vmatprep.subr.bf16.mxu0 0
    %2102 = vmatpush1.bf16.xpose.msra.mxu0 0
    %2103 = vmatprep.subr.bf16.mxu0 0
    %2104 = vmatpush1.bf16.xpose.msra.mxu0 0
    %2105 = vmatprep.subr.bf16.mxu0 0
    %2106 = vmatpush1.bf16.xpose.msra.mxu0 0
    %2107 = vmatprep.subr.bf16.mxu0 0
    %2108 = vmatpush1.bf16.xpose.msra.mxu0 0
    %2109 = vmatprep.subr.bf16.mxu0 0
    %2110 = vmatpush1.bf16.xpose.msra.mxu0 0
    %2111 = vmatprep.subr.bf16.mxu0 0
    %2112 = vmatpush1.bf16.xpose.msra.mxu0 0
    %2113 = vmatprep.subr.bf16.mxu0 0
    %2114 = vmatpush1.bf16.xpose.msra.mxu0 0
    %2115 = vmatprep.subr.bf16.mxu0 0
    %2116 = vmatpush1.bf16.xpose.msra.mxu0 0
    %2117 = vmatprep.subr.bf16.mxu0 0
    %2118 = vmatpush1.bf16.xpose.msra.mxu0 0
    %2119 = vmatprep.subr.bf16.mxu0 0
    %2120 = vmatpush1.bf16.xpose.msra.mxu0 0
    %2121 = vmatprep.mubr.bf16.mxu0 %v193
    %2122 = vmatmul.mubr.bf16.gmra.mrb[0].mxu0 %v192
    %v2123 = vpop.f32.mrb[0].mxu0
    %v2124 = vadd.f32 %v2084, %v2123
    %v2125 = vpop.f32.mrb[0].mxu0
    %v2126 = vpop.f32.mrb[0].mxu0
    %v2127 = vpop.f32.mrb[0].mxu0
    %2128 = vdwg.mxu0
    %2129 = vmatprep.subr.bf16.mxu0 %v602
    %2130 = vmatpush1.bf16.xpose.msra.mxu0 %v601
    %2131 = vmatprep.subr.bf16.mxu0 0
    %2132 = vmatpush1.bf16.xpose.msra.mxu0 0
    %2133 = vmatprep.subr.bf16.mxu0 0
    %2134 = vmatpush1.bf16.xpose.msra.mxu0 0
    %2135 = vmatprep.subr.bf16.mxu0 0
    %2136 = vmatpush1.bf16.xpose.msra.mxu0 0
    %2137 = vmatprep.subr.bf16.mxu0 0
    %2138 = vmatpush1.bf16.xpose.msra.mxu0 0
    %2139 = vmatprep.subr.bf16.mxu0 0
    %2140 = vmatpush1.bf16.xpose.msra.mxu0 0
    %2141 = vmatprep.subr.bf16.mxu0 0
    %2142 = vmatpush1.bf16.xpose.msra.mxu0 0
    %2143 = vmatprep.subr.bf16.mxu0 0
    %2144 = vmatpush1.bf16.xpose.msra.mxu0 0
    %2145 = vmatprep.subr.bf16.mxu0 0
    %2146 = vmatpush1.bf16.xpose.msra.mxu0 0
    %2147 = vmatprep.subr.bf16.mxu0 0
    %2148 = vmatpush1.bf16.xpose.msra.mxu0 0
    %2149 = vmatprep.subr.bf16.mxu0 0
    %2150 = vmatpush1.bf16.xpose.msra.mxu0 0
    %2151 = vmatprep.subr.bf16.mxu0 0
    %2152 = vmatpush1.bf16.xpose.msra.mxu0 0
    %2153 = vmatprep.subr.bf16.mxu0 0
    %2154 = vmatpush1.bf16.xpose.msra.mxu0 0
    %2155 = vmatprep.subr.bf16.mxu0 0
    %2156 = vmatpush1.bf16.xpose.msra.mxu0 0
    %2157 = vmatprep.subr.bf16.mxu0 0
    %2158 = vmatpush1.bf16.xpose.msra.mxu0 0
    %2159 = vmatprep.subr.bf16.mxu0 0
    %2160 = vmatpush1.bf16.xpose.msra.mxu0 0
    %2161 = vmatprep.mubr.bf16.mxu0 %v195
    %2162 = vmatmul.mubr.bf16.gmra.mrb[0].mxu0 %v194
    %v2163 = vpop.f32.mrb[0].mxu0
    %v2164 = vadd.f32 %v2124, %v2163
    %v2165 = vpop.f32.mrb[0].mxu0
    %v2166 = vpop.f32.mrb[0].mxu0
    %v2167 = vpop.f32.mrb[0].mxu0
    %2168 = vdwg.mxu0
    %2169 = vmatprep.subr.bf16.mxu0 %v604
    %2170 = vmatpush1.bf16.xpose.msra.mxu0 %v603
    %2171 = vmatprep.subr.bf16.mxu0 0
    %2172 = vmatpush1.bf16.xpose.msra.mxu0 0
    %2173 = vmatprep.subr.bf16.mxu0 0
    %2174 = vmatpush1.bf16.xpose.msra.mxu0 0
    %2175 = vmatprep.subr.bf16.mxu0 0
    %2176 = vmatpush1.bf16.xpose.msra.mxu0 0
    %2177 = vmatprep.subr.bf16.mxu0 0
    %2178 = vmatpush1.bf16.xpose.msra.mxu0 0
    %2179 = vmatprep.subr.bf16.mxu0 0
    %2180 = vmatpush1.bf16.xpose.msra.mxu0 0
    %2181 = vmatprep.subr.bf16.mxu0 0
    %2182 = vmatpush1.bf16.xpose.msra.mxu0 0
    %2183 = vmatprep.subr.bf16.mxu0 0
    %2184 = vmatpush1.bf16.xpose.msra.mxu0 0
    %2185 = vmatprep.subr.bf16.mxu0 0
    %2186 = vmatpush1.bf16.xpose.msra.mxu0 0
    %2187 = vmatprep.subr.bf16.mxu0 0
    %2188 = vmatpush1.bf16.xpose.msra.mxu0 0
    %2189 = vmatprep.subr.bf16.mxu0 0
    %2190 = vmatpush1.bf16.xpose.msra.mxu0 0
    %2191 = vmatprep.subr.bf16.mxu0 0
    %2192 = vmatpush1.bf16.xpose.msra.mxu0 0
    %2193 = vmatprep.subr.bf16.mxu0 0
    %2194 = vmatpush1.bf16.xpose.msra.mxu0 0
    %2195 = vmatprep.subr.bf16.mxu0 0
    %2196 = vmatpush1.bf16.xpose.msra.mxu0 0
    %2197 = vmatprep.subr.bf16.mxu0 0
    %2198 = vmatpush1.bf16.xpose.msra.mxu0 0
    %2199 = vmatprep.subr.bf16.mxu0 0
    %2200 = vmatpush1.bf16.xpose.msra.mxu0 0
    %2201 = vmatprep.mubr.bf16.mxu0 %v197
    %2202 = vmatmul.mubr.bf16.gmra.mrb[0].mxu0 %v196
    %v2203 = vpop.f32.mrb[0].mxu0
    %v2204 = vadd.f32 %v2164, %v2203
    %v2205 = vpop.f32.mrb[0].mxu0
    %v2206 = vpop.f32.mrb[0].mxu0
    %v2207 = vpop.f32.mrb[0].mxu0
    %2208 = vdwg.mxu0
    %2209 = vmatprep.subr.bf16.mxu0 %v606
    %2210 = vmatpush1.bf16.xpose.msra.mxu0 %v605
    %2211 = vmatprep.subr.bf16.mxu0 0
    %2212 = vmatpush1.bf16.xpose.msra.mxu0 0
    %2213 = vmatprep.subr.bf16.mxu0 0
    %2214 = vmatpush1.bf16.xpose.msra.mxu0 0
    %2215 = vmatprep.subr.bf16.mxu0 0
    %2216 = vmatpush1.bf16.xpose.msra.mxu0 0
    %2217 = vmatprep.subr.bf16.mxu0 0
    %2218 = vmatpush1.bf16.xpose.msra.mxu0 0
    %2219 = vmatprep.subr.bf16.mxu0 0
    %2220 = vmatpush1.bf16.xpose.msra.mxu0 0
    %2221 = vmatprep.subr.bf16.mxu0 0
    %2222 = vmatpush1.bf16.xpose.msra.mxu0 0
    %2223 = vmatprep.subr.bf16.mxu0 0
    %2224 = vmatpush1.bf16.xpose.msra.mxu0 0
    %2225 = vmatprep.subr.bf16.mxu0 0
    %2226 = vmatpush1.bf16.xpose.msra.mxu0 0
    %2227 = vmatprep.subr.bf16.mxu0 0
    %2228 = vmatpush1.bf16.xpose.msra.mxu0 0
    %2229 = vmatprep.subr.bf16.mxu0 0
    %2230 = vmatpush1.bf16.xpose.msra.mxu0 0
    %2231 = vmatprep.subr.bf16.mxu0 0
    %2232 = vmatpush1.bf16.xpose.msra.mxu0 0
    %2233 = vmatprep.subr.bf16.mxu0 0
    %2234 = vmatpush1.bf16.xpose.msra.mxu0 0
    %2235 = vmatprep.subr.bf16.mxu0 0
    %2236 = vmatpush1.bf16.xpose.msra.mxu0 0
    %2237 = vmatprep.subr.bf16.mxu0 0
    %2238 = vmatpush1.bf16.xpose.msra.mxu0 0
    %2239 = vmatprep.subr.bf16.mxu0 0
    %2240 = vmatpush1.bf16.xpose.msra.mxu0 0
    %2241 = vmatprep.mubr.bf16.mxu0 %v199
    %2242 = vmatmul.mubr.bf16.gmra.mrb[0].mxu0 %v198
    %v2243 = vpop.f32.mrb[0].mxu0
    %v2244 = vadd.f32 %v2204, %v2243
    %v2245 = vpop.f32.mrb[0].mxu0
    %v2246 = vpop.f32.mrb[0].mxu0
    %v2247 = vpop.f32.mrb[0].mxu0
    %2248 = vdwg.mxu0
    %2249 = vmatprep.subr.bf16.mxu0 %v608
    %2250 = vmatpush1.bf16.xpose.msra.mxu0 %v607
    %2251 = vmatprep.subr.bf16.mxu0 0
    %2252 = vmatpush1.bf16.xpose.msra.mxu0 0
    %2253 = vmatprep.subr.bf16.mxu0 0
    %2254 = vmatpush1.bf16.xpose.msra.mxu0 0
    %2255 = vmatprep.subr.bf16.mxu0 0
    %2256 = vmatpush1.bf16.xpose.msra.mxu0 0
    %2257 = vmatprep.subr.bf16.mxu0 0
    %2258 = vmatpush1.bf16.xpose.msra.mxu0 0
    %2259 = vmatprep.subr.bf16.mxu0 0
    %2260 = vmatpush1.bf16.xpose.msra.mxu0 0
    %2261 = vmatprep.subr.bf16.mxu0 0
    %2262 = vmatpush1.bf16.xpose.msra.mxu0 0
    %2263 = vmatprep.subr.bf16.mxu0 0
    %2264 = vmatpush1.bf16.xpose.msra.mxu0 0
    %2265 = vmatprep.subr.bf16.mxu0 0
    %2266 = vmatpush1.bf16.xpose.msra.mxu0 0
    %2267 = vmatprep.subr.bf16.mxu0 0
    %2268 = vmatpush1.bf16.xpose.msra.mxu0 0
    %2269 = vmatprep.subr.bf16.mxu0 0
    %2270 = vmatpush1.bf16.xpose.msra.mxu0 0
    %2271 = vmatprep.subr.bf16.mxu0 0
    %2272 = vmatpush1.bf16.xpose.msra.mxu0 0
    %2273 = vmatprep.subr.bf16.mxu0 0
    %2274 = vmatpush1.bf16.xpose.msra.mxu0 0
    %2275 = vmatprep.subr.bf16.mxu0 0
    %2276 = vmatpush1.bf16.xpose.msra.mxu0 0
    %2277 = vmatprep.subr.bf16.mxu0 0
    %2278 = vmatpush1.bf16.xpose.msra.mxu0 0
    %2279 = vmatprep.subr.bf16.mxu0 0
    %2280 = vmatpush1.bf16.xpose.msra.mxu0 0
    %2281 = vmatprep.mubr.bf16.mxu0 %v201
    %2282 = vmatmul.mubr.bf16.gmra.mrb[0].mxu0 %v200
    %v2283 = vpop.f32.mrb[0].mxu0
    %v2284 = vadd.f32 %v2244, %v2283
    %v2285 = vpop.f32.mrb[0].mxu0
    %v2286 = vpop.f32.mrb[0].mxu0
    %v2287 = vpop.f32.mrb[0].mxu0
    %2288 = vdwg.mxu0
    %vm2289 = vcmask 80896
    %2290 = vst.msk [vmem:[#allocation7] sm:$0xff] %vm2289, %v2284
    // Predicated region
    $region22: #{tpu_custom_call.1} parent=1 // pred_check
      _
    $region23: #{tpu_custom_call.1} parent=1 // pred_check_branch
      %2292 = sbr.rel (0) target = $region25
    $region24: #{tpu_custom_call.1} parent=1 // pred_region
      %s2294 = ssub.s32 128, 128
      %2295 = vsyncadd [#allocation4], %s2294
      %s2297 = sshll.u32 [#allocation7], 4
      %s2298 = int_to_ptr.vmem [resolvable:$true] %s2297
      %2300 = dma.vmem_to_hbm [thread:$0]  %s2298, 128, %s3, [#allocation4]
    $region25: #{tpu_custom_call.1} parent=1 // pred_fallthru
      _
    // Predicated region
    $region26: #{tpu_custom_call.1} parent=1 // pred_check
      _
    $region27: #{tpu_custom_call.1} parent=1 // pred_check_branch
      %2302 = sbr.rel (0) target = $region29
    $region28: #{tpu_custom_call.1} parent=1 // pred_region
      %2303 = dma.done [#allocation4], 128
    $region29: #{tpu_custom_call.1} parent=1 // pred_fallthru
      _
    %2304 = vsyncpa [#allocation3], 1
    %2305 = vsyncpa [#allocation6], 1
    %2306 = vsyncpa [#allocation4], 1

</llo_original>
